<compile_context>
chip_gen: v7x
topology: tpu7x:2x2x1
jax: 0.10.0
libtpu: 0.0.40
codegen_flags: <defaults>
</compile_context>

<pallas_src>
import jax
import jax.numpy as jnp
import numpy as np
from jax.experimental import pallas as pl
from jax.experimental.pallas import tpu as pltpu


# ----------------------------- Pallas kernel ------------------------------ #

def seq2seq_kernel(x_ref,                                    # (T, B, F) time-major
                   e_wih_ref, e_whh_ref, e_b_ref,            # (F,4H), (H,4H), (1,4H)
                   d_wih_ref, d_whh_ref, d_b_ref,            # (F,4H), (H,4H), (1,4H)
                   d_wf_ref, d_bf_ref,                       # (H,4H), (1,4H)  fc-folded
                   wfc_ref, bfc_ref,                         # (H,F), (1,F)
                   pred_ref):                                # (T*B, F) time-major flat
    T, B, F = x_ref.shape
    H = e_whh_ref.shape[0]
    G = 4 * H

    # Hoisted weight loads (read each VMEM-resident weight exactly once).
    e_whh = e_whh_ref[...]
    d_whh = d_whh_ref[...]
    d_wf = d_wf_ref[...]
    wfc = wfc_ref[...]

    def gates_to_state(gates, c):
        # gates: (B, 4H) lane-dense; static 32-lane slices extract i/f/g/o.
        i = jax.nn.sigmoid(gates[:, 0:H])
        f = jax.nn.sigmoid(gates[:, H:2 * H])
        g = jnp.tanh(gates[:, 2 * H:3 * H])
        o = jax.nn.sigmoid(gates[:, 3 * H:4 * H])
        c_new = f * c + i * g
        return o * jnp.tanh(c_new), c_new

    # ---- Batched, non-serial work (off the recurrence critical path) ---- #
    # Encoder input projections for ALL T steps in one matmul, bias folded in.
    x_flat = x_ref[...].reshape(T * B, F)
    xp_enc = (jnp.dot(x_flat, e_wih_ref[...], preferred_element_type=jnp.float32)
              + e_b_ref[...])                                  # (T*B, 4H)
    # Decoder step-0 input projection (decoder_input = source[:, 0, :]), bias folded in.
    xp_dec0 = (jnp.dot(x_ref[0], d_wih_ref[...], preferred_element_type=jnp.float32)
               + d_b_ref[...])                                 # (B, 4H)
    # Pre-broadcast the fused decoder bias once (not per unrolled step).
    d_bf_b = jnp.broadcast_to(d_bf_ref[...], (B, G))

    # ---- Encoder recurrence: one (B,H)x(H,4H) matmul per step on the chain ---- #
    h = jnp.zeros((B, H), jnp.float32)
    c = jnp.zeros((B, H), jnp.float32)
    for t in range(T):                   # T small & static -> full unroll
        gates = xp_enc[t * B:(t + 1) * B, :] + jnp.dot(
            h, e_whh, preferred_element_type=jnp.float32)
        h, c = gates_to_state(gates, c)

    # ---- Decoder step 0 (input projection already computed above) ---- #
    gates = xp_dec0 + jnp.dot(h, d_whh, preferred_element_type=jnp.float32)
    h, c = gates_to_state(gates, c)
    hs = [h]

    # ---- Decoder steps 1..T-1: fc head folded into the recurrence ---- #
    # x_t = h_{t-1} @ Wfc + bfc  =>  gates_t = h_{t-1} @ (Wfc@Wih + Whh) + (bfc@Wih + b)
    for _ in range(1, T):
        gates = jnp.dot(h, d_wf, preferred_element_type=jnp.float32) + d_bf_b
        h, c = gates_to_state(gates, c)
        hs.append(h)

    # ---- All T predictions with one batched matmul and one writeback ---- #
    h_all = jnp.concatenate(hs, axis=0)                       # (T*B, H)
    pred_ref[...] = (jnp.dot(h_all, wfc, preferred_element_type=jnp.float32)
                     + bfc_ref[...])


# ------------------------------- Wrapper ----------------------------------- #

@jax.jit
def seq2seq_forward(source_btf, enc_params, dec_params):
    """source_btf: (B, T, F) batch-major (PyTorch convention). Returns (B, T, F)."""
    x_tbf = jnp.transpose(source_btf, (1, 0, 2)).astype(jnp.float32)
    T, B, F = x_tbf.shape

    e_wih, e_whh, e_b = enc_params["wih_t"], enc_params["whh_t"], enc_params["b"]
    d_wih, d_whh, d_b = dec_params["wih_t"], dec_params["whh_t"], dec_params["b"]
    wfc, bfc = dec_params["wfc_t"], dec_params["bfc"]

    # fc head folded into the decoder recurrence (exact linear identity).
    d_wf = wfc @ d_wih + d_whh            # (H, 4H)
    d_bf = bfc @ d_wih + d_b              # (1, 4H)

    vmem = pl.BlockSpec(memory_space=pltpu.MemorySpace.VMEM)
    preds_flat = pl.pallas_call(
        seq2seq_kernel,
        out_shape=jax.ShapeDtypeStruct((T * B, F), jnp.float32),
        in_specs=[vmem] * 11,
        out_specs=vmem,
    )(x_tbf, e_wih, e_whh, e_b, d_wih, d_whh, d_b, d_wf, d_bf, wfc, bfc)

    return jnp.transpose(preds_flat.reshape(T, B, F), (1, 0, 2))


# --------------------------- Pure-JAX reference ------------------------------ #

def _ref_cell(x, h, c, p):
    gates = x @ p["wih_t"] + h @ p["whh_t"] + p["b"]
    i, f, g, o = jnp.split(gates, 4, axis=-1)
    c = jax.nn.sigmoid(f) * c + jax.nn.sigmoid(i) * jnp.tanh(g)
    h = jax.nn.sigmoid(o) * jnp.tanh(c)
    return h, c


def seq2seq_reference(source_btf, enc_params, dec_params):
    B, T, F = source_btf.shape
    H = enc_params["whh_t"].shape[0]
    h = jnp.zeros((B, H), jnp.float32)
    c = jnp.zeros((B, H), jnp.float32)
    for t in range(T):
        h, c = _ref_cell(source_btf[:, t, :], h, c, enc_params)
    inp = source_btf[:, 0, :]
    preds = []
    for _ in range(T):
        h, c = _ref_cell(inp, h, c, dec_params)
        out = h @ dec_params["wfc_t"] + dec_params["bfc"]
        preds.append(out)
        inp = out
    return jnp.stack(preds, axis=1)


# --------------------------------- Main -------------------------------------- #

def _init_params(key, F, H):
    ks = jax.random.split(key, 8)
    s = 0.1
    enc = {
        "wih_t": s * jax.random.normal(ks[0], (F, 4 * H), jnp.float32),
        "whh_t": s * jax.random.normal(ks[1], (H, 4 * H), jnp.float32),
        "b":     s * jax.random.normal(ks[2], (1, 4 * H), jnp.float32),
    }
    dec = {
        "wih_t": s * jax.random.normal(ks[3], (F, 4 * H), jnp.float32),
        "whh_t": s * jax.random.normal(ks[4], (H, 4 * H), jnp.float32),
        "b":     s * jax.random.normal(ks[5], (1, 4 * H), jnp.float32),
        "wfc_t": s * jax.random.normal(ks[6], (H, F), jnp.float32),
        "bfc":   s * jax.random.normal(ks[7], (1, F), jnp.float32),
    }
    return enc, dec


if __name__ == "__main__":
    # B = 8 fills the f32 sublane count (review: raise effective batch toward >= 8 rows).
    B, T, F, H = 8, 8, 8, 32
    key = jax.random.PRNGKey(0)
    k_x, k_p = jax.random.split(key)
    source = jax.random.normal(k_x, (B, T, F), jnp.float32)
    enc_params, dec_params = _init_params(k_p, F, H)

    preds = seq2seq_forward(source, enc_params, dec_params)
    preds = jax.block_until_ready(preds)

    ref = seq2seq_reference(source, enc_params, dec_params)
    # fc-folding reassociates f32 math -> allow ~1e-5 level drift.
    np.testing.assert_allclose(np.asarray(preds), np.asarray(ref),
                               rtol=2e-4, atol=2e-5)
    assert preds.shape == (B, T, F)
    print("KERNEL_OK")
</pallas_src>

<mosaic_0001>
module attributes {stable_mosaic.version = 11 : i64} {
  func.func @seq2seq_kernel(%arg0: memref<8x8x8xf32, #tpu.memory_space<vmem>>, %arg1: memref<8x128xf32, #tpu.memory_space<vmem>>, %arg2: memref<32x128xf32, #tpu.memory_space<vmem>>, %arg3: memref<1x128xf32, #tpu.memory_space<vmem>>, %arg4: memref<8x128xf32, #tpu.memory_space<vmem>>, %arg5: memref<32x128xf32, #tpu.memory_space<vmem>>, %arg6: memref<1x128xf32, #tpu.memory_space<vmem>>, %arg7: memref<32x128xf32, #tpu.memory_space<vmem>>, %arg8: memref<1x128xf32, #tpu.memory_space<vmem>>, %arg9: memref<32x8xf32, #tpu.memory_space<vmem>>, %arg10: memref<1x8xf32, #tpu.memory_space<vmem>>, %arg11: memref<64x8xf32, #tpu.memory_space<vmem>>) attributes {dimension_semantics = [], scalar_prefetch = 0 : i64, scratch_operands = 0 : i64, tpu.core_type = #tpu.core_type<tc>} {
    %c0 = arith.constant 0 : index
    %c0_0 = arith.constant 0 : index
    %0 = vector.load %arg2[%c0, %c0_0] : memref<32x128xf32, #tpu.memory_space<vmem>>, vector<32x128xf32>
    %c0_1 = arith.constant 0 : index
    %c0_2 = arith.constant 0 : index
    %1 = vector.load %arg5[%c0_1, %c0_2] : memref<32x128xf32, #tpu.memory_space<vmem>>, vector<32x128xf32>
    %c0_3 = arith.constant 0 : index
    %c0_4 = arith.constant 0 : index
    %2 = vector.load %arg7[%c0_3, %c0_4] : memref<32x128xf32, #tpu.memory_space<vmem>>, vector<32x128xf32>
    %c0_5 = arith.constant 0 : index
    %c0_6 = arith.constant 0 : index
    %3 = vector.load %arg9[%c0_5, %c0_6] : memref<32x8xf32, #tpu.memory_space<vmem>>, vector<32x8xf32>
    %c0_7 = arith.constant 0 : index
    %c0_8 = arith.constant 0 : index
    %c0_9 = arith.constant 0 : index
    %4 = vector.load %arg0[%c0_7, %c0_8, %c0_9] : memref<8x8x8xf32, #tpu.memory_space<vmem>>, vector<8x8x8xf32>
    %5 = vector.shape_cast %4 : vector<8x8x8xf32> to vector<64x8xf32>
    %c0_10 = arith.constant 0 : index
    %c0_11 = arith.constant 0 : index
    %6 = vector.load %arg1[%c0_10, %c0_11] : memref<8x128xf32, #tpu.memory_space<vmem>>, vector<8x128xf32>
    %cst = arith.constant dense<0.000000e+00> : vector<64x128xf32>
    %7 = tpu.matmul %5, %6, %cst {dimension_numbers = #tpu.dot_dimension_numbers<[1], [0], [0], [1], [0, 0, 1, 1], [], []>} : vector<64x8xf32>, vector<8x128xf32>, vector<64x128xf32> -> vector<64x128xf32>
    %c0_12 = arith.constant 0 : index
    %c0_13 = arith.constant 0 : index
    %8 = vector.load %arg3[%c0_12, %c0_13] : memref<1x128xf32, #tpu.memory_space<vmem>>, vector<1x128xf32>
    %9 = vector.broadcast %8 : vector<1x128xf32> to vector<64x128xf32>
    %10 = arith.addf %7, %9 : vector<64x128xf32>
    %c0_14 = arith.constant 0 : index
    %c0_15 = arith.constant 0 : index
    %c0_16 = arith.constant 0 : index
    %11 = vector.load %arg0[%c0_14, %c0_15, %c0_16] : memref<8x8x8xf32, #tpu.memory_space<vmem>>, vector<1x8x8xf32>
    %12 = vector.shape_cast %11 : vector<1x8x8xf32> to vector<8x8xf32>
    %c0_17 = arith.constant 0 : index
    %c0_18 = arith.constant 0 : index
    %13 = vector.load %arg4[%c0_17, %c0_18] : memref<8x128xf32, #tpu.memory_space<vmem>>, vector<8x128xf32>
    %cst_19 = arith.constant dense<0.000000e+00> : vector<8x128xf32>
    %14 = tpu.matmul %12, %13, %cst_19 {dimension_numbers = #tpu.dot_dimension_numbers<[1], [0], [0], [1], [0, 0, 1, 1], [], []>} : vector<8x8xf32>, vector<8x128xf32>, vector<8x128xf32> -> vector<8x128xf32>
    %c0_20 = arith.constant 0 : index
    %c0_21 = arith.constant 0 : index
    %15 = vector.load %arg6[%c0_20, %c0_21] : memref<1x128xf32, #tpu.memory_space<vmem>>, vector<1x128xf32>
    %16 = vector.broadcast %15 : vector<1x128xf32> to vector<8x128xf32>
    %17 = arith.addf %14, %16 : vector<8x128xf32>
    %c0_22 = arith.constant 0 : index
    %c0_23 = arith.constant 0 : index
    %18 = vector.load %arg8[%c0_22, %c0_23] : memref<1x128xf32, #tpu.memory_space<vmem>>, vector<1x128xf32>
    %19 = vector.shape_cast %18 : vector<1x128xf32> to vector<1x128xf32>
    %20 = vector.broadcast %19 : vector<1x128xf32> to vector<8x128xf32>
    %cst_24 = arith.constant 0.000000e+00 : f32
    %21 = vector.broadcast %cst_24 : f32 to vector<8x32xf32>
    %cst_25 = arith.constant 0.000000e+00 : f32
    %22 = vector.broadcast %cst_25 : f32 to vector<8x32xf32>
    %23 = vector.extract_strided_slice %10 {offsets = [0, 0], sizes = [8, 128], strides = [1, 1]} : vector<64x128xf32> to vector<8x128xf32>
    %cst_26 = arith.constant dense<0.000000e+00> : vector<8x128xf32>
    %24 = tpu.matmul %21, %0, %cst_26 {dimension_numbers = #tpu.dot_dimension_numbers<[1], [0], [0], [1], [0, 0, 1, 1], [], []>} : vector<8x32xf32>, vector<32x128xf32>, vector<8x128xf32> -> vector<8x128xf32>
    %25 = arith.addf %23, %24 : vector<8x128xf32>
    %26 = vector.extract_strided_slice %25 {offsets = [0, 0], sizes = [8, 32], strides = [1, 1]} : vector<8x128xf32> to vector<8x32xf32>
    %27 = arith.negf %26 : vector<8x32xf32>
    %28 = math.exp %27 : vector<8x32xf32>
    %cst_27 = arith.constant 1.000000e+00 : f32
    %29 = vector.broadcast %cst_27 : f32 to vector<8x32xf32>
    %30 = arith.addf %29, %28 : vector<8x32xf32>
    %31 = arith.divf %29, %30 : vector<8x32xf32>
    %32 = vector.extract_strided_slice %25 {offsets = [0, 32], sizes = [8, 32], strides = [1, 1]} : vector<8x128xf32> to vector<8x32xf32>
    %33 = arith.negf %32 : vector<8x32xf32>
    %34 = math.exp %33 : vector<8x32xf32>
    %cst_28 = arith.constant 1.000000e+00 : f32
    %35 = vector.broadcast %cst_28 : f32 to vector<8x32xf32>
    %36 = arith.addf %35, %34 : vector<8x32xf32>
    %37 = arith.divf %35, %36 : vector<8x32xf32>
    %38 = vector.extract_strided_slice %25 {offsets = [0, 64], sizes = [8, 32], strides = [1, 1]} : vector<8x128xf32> to vector<8x32xf32>
    %39 = math.tanh %38 : vector<8x32xf32>
    %40 = vector.extract_strided_slice %25 {offsets = [0, 96], sizes = [8, 32], strides = [1, 1]} : vector<8x128xf32> to vector<8x32xf32>
    %41 = arith.negf %40 : vector<8x32xf32>
    %42 = math.exp %41 : vector<8x32xf32>
    %cst_29 = arith.constant 1.000000e+00 : f32
    %43 = vector.broadcast %cst_29 : f32 to vector<8x32xf32>
    %44 = arith.addf %43, %42 : vector<8x32xf32>
    %45 = arith.divf %43, %44 : vector<8x32xf32>
    %46 = arith.mulf %37, %22 : vector<8x32xf32>
    %47 = arith.mulf %31, %39 : vector<8x32xf32>
    %48 = arith.addf %46, %47 : vector<8x32xf32>
    %49 = math.tanh %48 : vector<8x32xf32>
    %50 = arith.mulf %45, %49 : vector<8x32xf32>
    %51 = vector.extract_strided_slice %10 {offsets = [8, 0], sizes = [8, 128], strides = [1, 1]} : vector<64x128xf32> to vector<8x128xf32>
    %cst_30 = arith.constant dense<0.000000e+00> : vector<8x128xf32>
    %52 = tpu.matmul %50, %0, %cst_30 {dimension_numbers = #tpu.dot_dimension_numbers<[1], [0], [0], [1], [0, 0, 1, 1], [], []>} : vector<8x32xf32>, vector<32x128xf32>, vector<8x128xf32> -> vector<8x128xf32>
    %53 = arith.addf %51, %52 : vector<8x128xf32>
    %54 = vector.extract_strided_slice %53 {offsets = [0, 0], sizes = [8, 32], strides = [1, 1]} : vector<8x128xf32> to vector<8x32xf32>
    %55 = arith.negf %54 : vector<8x32xf32>
    %56 = math.exp %55 : vector<8x32xf32>
    %cst_31 = arith.constant 1.000000e+00 : f32
    %57 = vector.broadcast %cst_31 : f32 to vector<8x32xf32>
    %58 = arith.addf %57, %56 : vector<8x32xf32>
    %59 = arith.divf %57, %58 : vector<8x32xf32>
    %60 = vector.extract_strided_slice %53 {offsets = [0, 32], sizes = [8, 32], strides = [1, 1]} : vector<8x128xf32> to vector<8x32xf32>
    %61 = arith.negf %60 : vector<8x32xf32>
    %62 = math.exp %61 : vector<8x32xf32>
    %cst_32 = arith.constant 1.000000e+00 : f32
    %63 = vector.broadcast %cst_32 : f32 to vector<8x32xf32>
    %64 = arith.addf %63, %62 : vector<8x32xf32>
    %65 = arith.divf %63, %64 : vector<8x32xf32>
    %66 = vector.extract_strided_slice %53 {offsets = [0, 64], sizes = [8, 32], strides = [1, 1]} : vector<8x128xf32> to vector<8x32xf32>
    %67 = math.tanh %66 : vector<8x32xf32>
    %68 = vector.extract_strided_slice %53 {offsets = [0, 96], sizes = [8, 32], strides = [1, 1]} : vector<8x128xf32> to vector<8x32xf32>
    %69 = arith.negf %68 : vector<8x32xf32>
    %70 = math.exp %69 : vector<8x32xf32>
    %cst_33 = arith.constant 1.000000e+00 : f32
    %71 = vector.broadcast %cst_33 : f32 to vector<8x32xf32>
    %72 = arith.addf %71, %70 : vector<8x32xf32>
    %73 = arith.divf %71, %72 : vector<8x32xf32>
    %74 = arith.mulf %65, %48 : vector<8x32xf32>
    %75 = arith.mulf %59, %67 : vector<8x32xf32>
    %76 = arith.addf %74, %75 : vector<8x32xf32>
    %77 = math.tanh %76 : vector<8x32xf32>
    %78 = arith.mulf %73, %77 : vector<8x32xf32>
    %79 = vector.extract_strided_slice %10 {offsets = [16, 0], sizes = [8, 128], strides = [1, 1]} : vector<64x128xf32> to vector<8x128xf32>
    %cst_34 = arith.constant dense<0.000000e+00> : vector<8x128xf32>
    %80 = tpu.matmul %78, %0, %cst_34 {dimension_numbers = #tpu.dot_dimension_numbers<[1], [0], [0], [1], [0, 0, 1, 1], [], []>} : vector<8x32xf32>, vector<32x128xf32>, vector<8x128xf32> -> vector<8x128xf32>
    %81 = arith.addf %79, %80 : vector<8x128xf32>
    %82 = vector.extract_strided_slice %81 {offsets = [0, 0], sizes = [8, 32], strides = [1, 1]} : vector<8x128xf32> to vector<8x32xf32>
    %83 = arith.negf %82 : vector<8x32xf32>
    %84 = math.exp %83 : vector<8x32xf32>
    %cst_35 = arith.constant 1.000000e+00 : f32
    %85 = vector.broadcast %cst_35 : f32 to vector<8x32xf32>
    %86 = arith.addf %85, %84 : vector<8x32xf32>
    %87 = arith.divf %85, %86 : vector<8x32xf32>
    %88 = vector.extract_strided_slice %81 {offsets = [0, 32], sizes = [8, 32], strides = [1, 1]} : vector<8x128xf32> to vector<8x32xf32>
    %89 = arith.negf %88 : vector<8x32xf32>
    %90 = math.exp %89 : vector<8x32xf32>
    %cst_36 = arith.constant 1.000000e+00 : f32
    %91 = vector.broadcast %cst_36 : f32 to vector<8x32xf32>
    %92 = arith.addf %91, %90 : vector<8x32xf32>
    %93 = arith.divf %91, %92 : vector<8x32xf32>
    %94 = vector.extract_strided_slice %81 {offsets = [0, 64], sizes = [8, 32], strides = [1, 1]} : vector<8x128xf32> to vector<8x32xf32>
    %95 = math.tanh %94 : vector<8x32xf32>
    %96 = vector.extract_strided_slice %81 {offsets = [0, 96], sizes = [8, 32], strides = [1, 1]} : vector<8x128xf32> to vector<8x32xf32>
    %97 = arith.negf %96 : vector<8x32xf32>
    %98 = math.exp %97 : vector<8x32xf32>
    %cst_37 = arith.constant 1.000000e+00 : f32
    %99 = vector.broadcast %cst_37 : f32 to vector<8x32xf32>
    %100 = arith.addf %99, %98 : vector<8x32xf32>
    %101 = arith.divf %99, %100 : vector<8x32xf32>
    %102 = arith.mulf %93, %76 : vector<8x32xf32>
    %103 = arith.mulf %87, %95 : vector<8x32xf32>
    %104 = arith.addf %102, %103 : vector<8x32xf32>
    %105 = math.tanh %104 : vector<8x32xf32>
    %106 = arith.mulf %101, %105 : vector<8x32xf32>
    %107 = vector.extract_strided_slice %10 {offsets = [24, 0], sizes = [8, 128], strides = [1, 1]} : vector<64x128xf32> to vector<8x128xf32>
    %cst_38 = arith.constant dense<0.000000e+00> : vector<8x128xf32>
    %108 = tpu.matmul %106, %0, %cst_38 {dimension_numbers = #tpu.dot_dimension_numbers<[1], [0], [0], [1], [0, 0, 1, 1], [], []>} : vector<8x32xf32>, vector<32x128xf32>, vector<8x128xf32> -> vector<8x128xf32>
    %109 = arith.addf %107, %108 : vector<8x128xf32>
    %110 = vector.extract_strided_slice %109 {offsets = [0, 0], sizes = [8, 32], strides = [1, 1]} : vector<8x128xf32> to vector<8x32xf32>
    %111 = arith.negf %110 : vector<8x32xf32>
    %112 = math.exp %111 : vector<8x32xf32>
    %cst_39 = arith.constant 1.000000e+00 : f32
    %113 = vector.broadcast %cst_39 : f32 to vector<8x32xf32>
    %114 = arith.addf %113, %112 : vector<8x32xf32>
    %115 = arith.divf %113, %114 : vector<8x32xf32>
    %116 = vector.extract_strided_slice %109 {offsets = [0, 32], sizes = [8, 32], strides = [1, 1]} : vector<8x128xf32> to vector<8x32xf32>
    %117 = arith.negf %116 : vector<8x32xf32>
    %118 = math.exp %117 : vector<8x32xf32>
    %cst_40 = arith.constant 1.000000e+00 : f32
    %119 = vector.broadcast %cst_40 : f32 to vector<8x32xf32>
    %120 = arith.addf %119, %118 : vector<8x32xf32>
    %121 = arith.divf %119, %120 : vector<8x32xf32>
    %122 = vector.extract_strided_slice %109 {offsets = [0, 64], sizes = [8, 32], strides = [1, 1]} : vector<8x128xf32> to vector<8x32xf32>
    %123 = math.tanh %122 : vector<8x32xf32>
    %124 = vector.extract_strided_slice %109 {offsets = [0, 96], sizes = [8, 32], strides = [1, 1]} : vector<8x128xf32> to vector<8x32xf32>
    %125 = arith.negf %124 : vector<8x32xf32>
    %126 = math.exp %125 : vector<8x32xf32>
    %cst_41 = arith.constant 1.000000e+00 : f32
    %127 = vector.broadcast %cst_41 : f32 to vector<8x32xf32>
    %128 = arith.addf %127, %126 : vector<8x32xf32>
    %129 = arith.divf %127, %128 : vector<8x32xf32>
    %130 = arith.mulf %121, %104 : vector<8x32xf32>
    %131 = arith.mulf %115, %123 : vector<8x32xf32>
    %132 = arith.addf %130, %131 : vector<8x32xf32>
    %133 = math.tanh %132 : vector<8x32xf32>
    %134 = arith.mulf %129, %133 : vector<8x32xf32>
    %135 = vector.extract_strided_slice %10 {offsets = [32, 0], sizes = [8, 128], strides = [1, 1]} : vector<64x128xf32> to vector<8x128xf32>
    %cst_42 = arith.constant dense<0.000000e+00> : vector<8x128xf32>
    %136 = tpu.matmul %134, %0, %cst_42 {dimension_numbers = #tpu.dot_dimension_numbers<[1], [0], [0], [1], [0, 0, 1, 1], [], []>} : vector<8x32xf32>, vector<32x128xf32>, vector<8x128xf32> -> vector<8x128xf32>
    %137 = arith.addf %135, %136 : vector<8x128xf32>
    %138 = vector.extract_strided_slice %137 {offsets = [0, 0], sizes = [8, 32], strides = [1, 1]} : vector<8x128xf32> to vector<8x32xf32>
    %139 = arith.negf %138 : vector<8x32xf32>
    %140 = math.exp %139 : vector<8x32xf32>
    %cst_43 = arith.constant 1.000000e+00 : f32
    %141 = vector.broadcast %cst_43 : f32 to vector<8x32xf32>
    %142 = arith.addf %141, %140 : vector<8x32xf32>
    %143 = arith.divf %141, %142 : vector<8x32xf32>
    %144 = vector.extract_strided_slice %137 {offsets = [0, 32], sizes = [8, 32], strides = [1, 1]} : vector<8x128xf32> to vector<8x32xf32>
    %145 = arith.negf %144 : vector<8x32xf32>
    %146 = math.exp %145 : vector<8x32xf32>
    %cst_44 = arith.constant 1.000000e+00 : f32
    %147 = vector.broadcast %cst_44 : f32 to vector<8x32xf32>
    %148 = arith.addf %147, %146 : vector<8x32xf32>
    %149 = arith.divf %147, %148 : vector<8x32xf32>
    %150 = vector.extract_strided_slice %137 {offsets = [0, 64], sizes = [8, 32], strides = [1, 1]} : vector<8x128xf32> to vector<8x32xf32>
    %151 = math.tanh %150 : vector<8x32xf32>
    %152 = vector.extract_strided_slice %137 {offsets = [0, 96], sizes = [8, 32], strides = [1, 1]} : vector<8x128xf32> to vector<8x32xf32>
    %153 = arith.negf %152 : vector<8x32xf32>
    %154 = math.exp %153 : vector<8x32xf32>
    %cst_45 = arith.constant 1.000000e+00 : f32
    %155 = vector.broadcast %cst_45 : f32 to vector<8x32xf32>
    %156 = arith.addf %155, %154 : vector<8x32xf32>
    %157 = arith.divf %155, %156 : vector<8x32xf32>
    %158 = arith.mulf %149, %132 : vector<8x32xf32>
    %159 = arith.mulf %143, %151 : vector<8x32xf32>
    %160 = arith.addf %158, %159 : vector<8x32xf32>
    %161 = math.tanh %160 : vector<8x32xf32>
    %162 = arith.mulf %157, %161 : vector<8x32xf32>
    %163 = vector.extract_strided_slice %10 {offsets = [40, 0], sizes = [8, 128], strides = [1, 1]} : vector<64x128xf32> to vector<8x128xf32>
    %cst_46 = arith.constant dense<0.000000e+00> : vector<8x128xf32>
    %164 = tpu.matmul %162, %0, %cst_46 {dimension_numbers = #tpu.dot_dimension_numbers<[1], [0], [0], [1], [0, 0, 1, 1], [], []>} : vector<8x32xf32>, vector<32x128xf32>, vector<8x128xf32> -> vector<8x128xf32>
    %165 = arith.addf %163, %164 : vector<8x128xf32>
    %166 = vector.extract_strided_slice %165 {offsets = [0, 0], sizes = [8, 32], strides = [1, 1]} : vector<8x128xf32> to vector<8x32xf32>
    %167 = arith.negf %166 : vector<8x32xf32>
    %168 = math.exp %167 : vector<8x32xf32>
    %cst_47 = arith.constant 1.000000e+00 : f32
    %169 = vector.broadcast %cst_47 : f32 to vector<8x32xf32>
    %170 = arith.addf %169, %168 : vector<8x32xf32>
    %171 = arith.divf %169, %170 : vector<8x32xf32>
    %172 = vector.extract_strided_slice %165 {offsets = [0, 32], sizes = [8, 32], strides = [1, 1]} : vector<8x128xf32> to vector<8x32xf32>
    %173 = arith.negf %172 : vector<8x32xf32>
    %174 = math.exp %173 : vector<8x32xf32>
    %cst_48 = arith.constant 1.000000e+00 : f32
    %175 = vector.broadcast %cst_48 : f32 to vector<8x32xf32>
    %176 = arith.addf %175, %174 : vector<8x32xf32>
    %177 = arith.divf %175, %176 : vector<8x32xf32>
    %178 = vector.extract_strided_slice %165 {offsets = [0, 64], sizes = [8, 32], strides = [1, 1]} : vector<8x128xf32> to vector<8x32xf32>
    %179 = math.tanh %178 : vector<8x32xf32>
    %180 = vector.extract_strided_slice %165 {offsets = [0, 96], sizes = [8, 32], strides = [1, 1]} : vector<8x128xf32> to vector<8x32xf32>
    %181 = arith.negf %180 : vector<8x32xf32>
    %182 = math.exp %181 : vector<8x32xf32>
    %cst_49 = arith.constant 1.000000e+00 : f32
    %183 = vector.broadcast %cst_49 : f32 to vector<8x32xf32>
    %184 = arith.addf %183, %182 : vector<8x32xf32>
    %185 = arith.divf %183, %184 : vector<8x32xf32>
    %186 = arith.mulf %177, %160 : vector<8x32xf32>
    %187 = arith.mulf %171, %179 : vector<8x32xf32>
    %188 = arith.addf %186, %187 : vector<8x32xf32>
    %189 = math.tanh %188 : vector<8x32xf32>
    %190 = arith.mulf %185, %189 : vector<8x32xf32>
    %191 = vector.extract_strided_slice %10 {offsets = [48, 0], sizes = [8, 128], strides = [1, 1]} : vector<64x128xf32> to vector<8x128xf32>
    %cst_50 = arith.constant dense<0.000000e+00> : vector<8x128xf32>
    %192 = tpu.matmul %190, %0, %cst_50 {dimension_numbers = #tpu.dot_dimension_numbers<[1], [0], [0], [1], [0, 0, 1, 1], [], []>} : vector<8x32xf32>, vector<32x128xf32>, vector<8x128xf32> -> vector<8x128xf32>
    %193 = arith.addf %191, %192 : vector<8x128xf32>
    %194 = vector.extract_strided_slice %193 {offsets = [0, 0], sizes = [8, 32], strides = [1, 1]} : vector<8x128xf32> to vector<8x32xf32>
    %195 = arith.negf %194 : vector<8x32xf32>
    %196 = math.exp %195 : vector<8x32xf32>
    %cst_51 = arith.constant 1.000000e+00 : f32
    %197 = vector.broadcast %cst_51 : f32 to vector<8x32xf32>
    %198 = arith.addf %197, %196 : vector<8x32xf32>
    %199 = arith.divf %197, %198 : vector<8x32xf32>
    %200 = vector.extract_strided_slice %193 {offsets = [0, 32], sizes = [8, 32], strides = [1, 1]} : vector<8x128xf32> to vector<8x32xf32>
    %201 = arith.negf %200 : vector<8x32xf32>
    %202 = math.exp %201 : vector<8x32xf32>
    %cst_52 = arith.constant 1.000000e+00 : f32
    %203 = vector.broadcast %cst_52 : f32 to vector<8x32xf32>
    %204 = arith.addf %203, %202 : vector<8x32xf32>
    %205 = arith.divf %203, %204 : vector<8x32xf32>
    %206 = vector.extract_strided_slice %193 {offsets = [0, 64], sizes = [8, 32], strides = [1, 1]} : vector<8x128xf32> to vector<8x32xf32>
    %207 = math.tanh %206 : vector<8x32xf32>
    %208 = vector.extract_strided_slice %193 {offsets = [0, 96], sizes = [8, 32], strides = [1, 1]} : vector<8x128xf32> to vector<8x32xf32>
    %209 = arith.negf %208 : vector<8x32xf32>
    %210 = math.exp %209 : vector<8x32xf32>
    %cst_53 = arith.constant 1.000000e+00 : f32
    %211 = vector.broadcast %cst_53 : f32 to vector<8x32xf32>
    %212 = arith.addf %211, %210 : vector<8x32xf32>
    %213 = arith.divf %211, %212 : vector<8x32xf32>
    %214 = arith.mulf %205, %188 : vector<8x32xf32>
    %215 = arith.mulf %199, %207 : vector<8x32xf32>
    %216 = arith.addf %214, %215 : vector<8x32xf32>
    %217 = math.tanh %216 : vector<8x32xf32>
    %218 = arith.mulf %213, %217 : vector<8x32xf32>
    %219 = vector.extract_strided_slice %10 {offsets = [56, 0], sizes = [8, 128], strides = [1, 1]} : vector<64x128xf32> to vector<8x128xf32>
    %cst_54 = arith.constant dense<0.000000e+00> : vector<8x128xf32>
    %220 = tpu.matmul %218, %0, %cst_54 {dimension_numbers = #tpu.dot_dimension_numbers<[1], [0], [0], [1], [0, 0, 1, 1], [], []>} : vector<8x32xf32>, vector<32x128xf32>, vector<8x128xf32> -> vector<8x128xf32>
    %221 = arith.addf %219, %220 : vector<8x128xf32>
    %222 = vector.extract_strided_slice %221 {offsets = [0, 0], sizes = [8, 32], strides = [1, 1]} : vector<8x128xf32> to vector<8x32xf32>
    %223 = arith.negf %222 : vector<8x32xf32>
    %224 = math.exp %223 : vector<8x32xf32>
    %cst_55 = arith.constant 1.000000e+00 : f32
    %225 = vector.broadcast %cst_55 : f32 to vector<8x32xf32>
    %226 = arith.addf %225, %224 : vector<8x32xf32>
    %227 = arith.divf %225, %226 : vector<8x32xf32>
    %228 = vector.extract_strided_slice %221 {offsets = [0, 32], sizes = [8, 32], strides = [1, 1]} : vector<8x128xf32> to vector<8x32xf32>
    %229 = arith.negf %228 : vector<8x32xf32>
    %230 = math.exp %229 : vector<8x32xf32>
    %cst_56 = arith.constant 1.000000e+00 : f32
    %231 = vector.broadcast %cst_56 : f32 to vector<8x32xf32>
    %232 = arith.addf %231, %230 : vector<8x32xf32>
    %233 = arith.divf %231, %232 : vector<8x32xf32>
    %234 = vector.extract_strided_slice %221 {offsets = [0, 64], sizes = [8, 32], strides = [1, 1]} : vector<8x128xf32> to vector<8x32xf32>
    %235 = math.tanh %234 : vector<8x32xf32>
    %236 = vector.extract_strided_slice %221 {offsets = [0, 96], sizes = [8, 32], strides = [1, 1]} : vector<8x128xf32> to vector<8x32xf32>
    %237 = arith.negf %236 : vector<8x32xf32>
    %238 = math.exp %237 : vector<8x32xf32>
    %cst_57 = arith.constant 1.000000e+00 : f32
    %239 = vector.broadcast %cst_57 : f32 to vector<8x32xf32>
    %240 = arith.addf %239, %238 : vector<8x32xf32>
    %241 = arith.divf %239, %240 : vector<8x32xf32>
    %242 = arith.mulf %233, %216 : vector<8x32xf32>
    %243 = arith.mulf %227, %235 : vector<8x32xf32>
    %244 = arith.addf %242, %243 : vector<8x32xf32>
    %245 = math.tanh %244 : vector<8x32xf32>
    %246 = arith.mulf %241, %245 : vector<8x32xf32>
    %cst_58 = arith.constant dense<0.000000e+00> : vector<8x128xf32>
    %247 = tpu.matmul %246, %1, %cst_58 {dimension_numbers = #tpu.dot_dimension_numbers<[1], [0], [0], [1], [0, 0, 1, 1], [], []>} : vector<8x32xf32>, vector<32x128xf32>, vector<8x128xf32> -> vector<8x128xf32>
    %248 = arith.addf %17, %247 : vector<8x128xf32>
    %249 = vector.extract_strided_slice %248 {offsets = [0, 0], sizes = [8, 32], strides = [1, 1]} : vector<8x128xf32> to vector<8x32xf32>
    %250 = arith.negf %249 : vector<8x32xf32>
    %251 = math.exp %250 : vector<8x32xf32>
    %cst_59 = arith.constant 1.000000e+00 : f32
    %252 = vector.broadcast %cst_59 : f32 to vector<8x32xf32>
    %253 = arith.addf %252, %251 : vector<8x32xf32>
    %254 = arith.divf %252, %253 : vector<8x32xf32>
    %255 = vector.extract_strided_slice %248 {offsets = [0, 32], sizes = [8, 32], strides = [1, 1]} : vector<8x128xf32> to vector<8x32xf32>
    %256 = arith.negf %255 : vector<8x32xf32>
    %257 = math.exp %256 : vector<8x32xf32>
    %cst_60 = arith.constant 1.000000e+00 : f32
    %258 = vector.broadcast %cst_60 : f32 to vector<8x32xf32>
    %259 = arith.addf %258, %257 : vector<8x32xf32>
    %260 = arith.divf %258, %259 : vector<8x32xf32>
    %261 = vector.extract_strided_slice %248 {offsets = [0, 64], sizes = [8, 32], strides = [1, 1]} : vector<8x128xf32> to vector<8x32xf32>
    %262 = math.tanh %261 : vector<8x32xf32>
    %263 = vector.extract_strided_slice %248 {offsets = [0, 96], sizes = [8, 32], strides = [1, 1]} : vector<8x128xf32> to vector<8x32xf32>
    %264 = arith.negf %263 : vector<8x32xf32>
    %265 = math.exp %264 : vector<8x32xf32>
    %cst_61 = arith.constant 1.000000e+00 : f32
    %266 = vector.broadcast %cst_61 : f32 to vector<8x32xf32>
    %267 = arith.addf %266, %265 : vector<8x32xf32>
    %268 = arith.divf %266, %267 : vector<8x32xf32>
    %269 = arith.mulf %260, %244 : vector<8x32xf32>
    %270 = arith.mulf %254, %262 : vector<8x32xf32>
    %271 = arith.addf %269, %270 : vector<8x32xf32>
    %272 = math.tanh %271 : vector<8x32xf32>
    %273 = arith.mulf %268, %272 : vector<8x32xf32>
    %cst_62 = arith.constant dense<0.000000e+00> : vector<8x128xf32>
    %274 = tpu.matmul %273, %2, %cst_62 {dimension_numbers = #tpu.dot_dimension_numbers<[1], [0], [0], [1], [0, 0, 1, 1], [], []>} : vector<8x32xf32>, vector<32x128xf32>, vector<8x128xf32> -> vector<8x128xf32>
    %275 = arith.addf %274, %20 : vector<8x128xf32>
    %276 = vector.extract_strided_slice %275 {offsets = [0, 0], sizes = [8, 32], strides = [1, 1]} : vector<8x128xf32> to vector<8x32xf32>
    %277 = arith.negf %276 : vector<8x32xf32>
    %278 = math.exp %277 : vector<8x32xf32>
    %cst_63 = arith.constant 1.000000e+00 : f32
    %279 = vector.broadcast %cst_63 : f32 to vector<8x32xf32>
    %280 = arith.addf %279, %278 : vector<8x32xf32>
    %281 = arith.divf %279, %280 : vector<8x32xf32>
    %282 = vector.extract_strided_slice %275 {offsets = [0, 32], sizes = [8, 32], strides = [1, 1]} : vector<8x128xf32> to vector<8x32xf32>
    %283 = arith.negf %282 : vector<8x32xf32>
    %284 = math.exp %283 : vector<8x32xf32>
    %cst_64 = arith.constant 1.000000e+00 : f32
    %285 = vector.broadcast %cst_64 : f32 to vector<8x32xf32>
    %286 = arith.addf %285, %284 : vector<8x32xf32>
    %287 = arith.divf %285, %286 : vector<8x32xf32>
    %288 = vector.extract_strided_slice %275 {offsets = [0, 64], sizes = [8, 32], strides = [1, 1]} : vector<8x128xf32> to vector<8x32xf32>
    %289 = math.tanh %288 : vector<8x32xf32>
    %290 = vector.extract_strided_slice %275 {offsets = [0, 96], sizes = [8, 32], strides = [1, 1]} : vector<8x128xf32> to vector<8x32xf32>
    %291 = arith.negf %290 : vector<8x32xf32>
    %292 = math.exp %291 : vector<8x32xf32>
    %cst_65 = arith.constant 1.000000e+00 : f32
    %293 = vector.broadcast %cst_65 : f32 to vector<8x32xf32>
    %294 = arith.addf %293, %292 : vector<8x32xf32>
    %295 = arith.divf %293, %294 : vector<8x32xf32>
    %296 = arith.mulf %287, %271 : vector<8x32xf32>
    %297 = arith.mulf %281, %289 : vector<8x32xf32>
    %298 = arith.addf %296, %297 : vector<8x32xf32>
    %299 = math.tanh %298 : vector<8x32xf32>
    %300 = arith.mulf %295, %299 : vector<8x32xf32>
    %cst_66 = arith.constant dense<0.000000e+00> : vector<8x128xf32>
    %301 = tpu.matmul %300, %2, %cst_66 {dimension_numbers = #tpu.dot_dimension_numbers<[1], [0], [0], [1], [0, 0, 1, 1], [], []>} : vector<8x32xf32>, vector<32x128xf32>, vector<8x128xf32> -> vector<8x128xf32>
    %302 = arith.addf %301, %20 : vector<8x128xf32>
    %303 = vector.extract_strided_slice %302 {offsets = [0, 0], sizes = [8, 32], strides = [1, 1]} : vector<8x128xf32> to vector<8x32xf32>
    %304 = arith.negf %303 : vector<8x32xf32>
    %305 = math.exp %304 : vector<8x32xf32>
    %cst_67 = arith.constant 1.000000e+00 : f32
    %306 = vector.broadcast %cst_67 : f32 to vector<8x32xf32>
    %307 = arith.addf %306, %305 : vector<8x32xf32>
    %308 = arith.divf %306, %307 : vector<8x32xf32>
    %309 = vector.extract_strided_slice %302 {offsets = [0, 32], sizes = [8, 32], strides = [1, 1]} : vector<8x128xf32> to vector<8x32xf32>
    %310 = arith.negf %309 : vector<8x32xf32>
    %311 = math.exp %310 : vector<8x32xf32>
    %cst_68 = arith.constant 1.000000e+00 : f32
    %312 = vector.broadcast %cst_68 : f32 to vector<8x32xf32>
    %313 = arith.addf %312, %311 : vector<8x32xf32>
    %314 = arith.divf %312, %313 : vector<8x32xf32>
    %315 = vector.extract_strided_slice %302 {offsets = [0, 64], sizes = [8, 32], strides = [1, 1]} : vector<8x128xf32> to vector<8x32xf32>
    %316 = math.tanh %315 : vector<8x32xf32>
    %317 = vector.extract_strided_slice %302 {offsets = [0, 96], sizes = [8, 32], strides = [1, 1]} : vector<8x128xf32> to vector<8x32xf32>
    %318 = arith.negf %317 : vector<8x32xf32>
    %319 = math.exp %318 : vector<8x32xf32>
    %cst_69 = arith.constant 1.000000e+00 : f32
    %320 = vector.broadcast %cst_69 : f32 to vector<8x32xf32>
    %321 = arith.addf %320, %319 : vector<8x32xf32>
    %322 = arith.divf %320, %321 : vector<8x32xf32>
    %323 = arith.mulf %314, %298 : vector<8x32xf32>
    %324 = arith.mulf %308, %316 : vector<8x32xf32>
    %325 = arith.addf %323, %324 : vector<8x32xf32>
    %326 = math.tanh %325 : vector<8x32xf32>
    %327 = arith.mulf %322, %326 : vector<8x32xf32>
    %cst_70 = arith.constant dense<0.000000e+00> : vector<8x128xf32>
    %328 = tpu.matmul %327, %2, %cst_70 {dimension_numbers = #tpu.dot_dimension_numbers<[1], [0], [0], [1], [0, 0, 1, 1], [], []>} : vector<8x32xf32>, vector<32x128xf32>, vector<8x128xf32> -> vector<8x128xf32>
    %329 = arith.addf %328, %20 : vector<8x128xf32>
    %330 = vector.extract_strided_slice %329 {offsets = [0, 0], sizes = [8, 32], strides = [1, 1]} : vector<8x128xf32> to vector<8x32xf32>
    %331 = arith.negf %330 : vector<8x32xf32>
    %332 = math.exp %331 : vector<8x32xf32>
    %cst_71 = arith.constant 1.000000e+00 : f32
    %333 = vector.broadcast %cst_71 : f32 to vector<8x32xf32>
    %334 = arith.addf %333, %332 : vector<8x32xf32>
    %335 = arith.divf %333, %334 : vector<8x32xf32>
    %336 = vector.extract_strided_slice %329 {offsets = [0, 32], sizes = [8, 32], strides = [1, 1]} : vector<8x128xf32> to vector<8x32xf32>
    %337 = arith.negf %336 : vector<8x32xf32>
    %338 = math.exp %337 : vector<8x32xf32>
    %cst_72 = arith.constant 1.000000e+00 : f32
    %339 = vector.broadcast %cst_72 : f32 to vector<8x32xf32>
    %340 = arith.addf %339, %338 : vector<8x32xf32>
    %341 = arith.divf %339, %340 : vector<8x32xf32>
    %342 = vector.extract_strided_slice %329 {offsets = [0, 64], sizes = [8, 32], strides = [1, 1]} : vector<8x128xf32> to vector<8x32xf32>
    %343 = math.tanh %342 : vector<8x32xf32>
    %344 = vector.extract_strided_slice %329 {offsets = [0, 96], sizes = [8, 32], strides = [1, 1]} : vector<8x128xf32> to vector<8x32xf32>
    %345 = arith.negf %344 : vector<8x32xf32>
    %346 = math.exp %345 : vector<8x32xf32>
    %cst_73 = arith.constant 1.000000e+00 : f32
    %347 = vector.broadcast %cst_73 : f32 to vector<8x32xf32>
    %348 = arith.addf %347, %346 : vector<8x32xf32>
    %349 = arith.divf %347, %348 : vector<8x32xf32>
    %350 = arith.mulf %341, %325 : vector<8x32xf32>
    %351 = arith.mulf %335, %343 : vector<8x32xf32>
    %352 = arith.addf %350, %351 : vector<8x32xf32>
    %353 = math.tanh %352 : vector<8x32xf32>
    %354 = arith.mulf %349, %353 : vector<8x32xf32>
    %cst_74 = arith.constant dense<0.000000e+00> : vector<8x128xf32>
    %355 = tpu.matmul %354, %2, %cst_74 {dimension_numbers = #tpu.dot_dimension_numbers<[1], [0], [0], [1], [0, 0, 1, 1], [], []>} : vector<8x32xf32>, vector<32x128xf32>, vector<8x128xf32> -> vector<8x128xf32>
    %356 = arith.addf %355, %20 : vector<8x128xf32>
    %357 = vector.extract_strided_slice %356 {offsets = [0, 0], sizes = [8, 32], strides = [1, 1]} : vector<8x128xf32> to vector<8x32xf32>
    %358 = arith.negf %357 : vector<8x32xf32>
    %359 = math.exp %358 : vector<8x32xf32>
    %cst_75 = arith.constant 1.000000e+00 : f32
    %360 = vector.broadcast %cst_75 : f32 to vector<8x32xf32>
    %361 = arith.addf %360, %359 : vector<8x32xf32>
    %362 = arith.divf %360, %361 : vector<8x32xf32>
    %363 = vector.extract_strided_slice %356 {offsets = [0, 32], sizes = [8, 32], strides = [1, 1]} : vector<8x128xf32> to vector<8x32xf32>
    %364 = arith.negf %363 : vector<8x32xf32>
    %365 = math.exp %364 : vector<8x32xf32>
    %cst_76 = arith.constant 1.000000e+00 : f32
    %366 = vector.broadcast %cst_76 : f32 to vector<8x32xf32>
    %367 = arith.addf %366, %365 : vector<8x32xf32>
    %368 = arith.divf %366, %367 : vector<8x32xf32>
    %369 = vector.extract_strided_slice %356 {offsets = [0, 64], sizes = [8, 32], strides = [1, 1]} : vector<8x128xf32> to vector<8x32xf32>
    %370 = math.tanh %369 : vector<8x32xf32>
    %371 = vector.extract_strided_slice %356 {offsets = [0, 96], sizes = [8, 32], strides = [1, 1]} : vector<8x128xf32> to vector<8x32xf32>
    %372 = arith.negf %371 : vector<8x32xf32>
    %373 = math.exp %372 : vector<8x32xf32>
    %cst_77 = arith.constant 1.000000e+00 : f32
    %374 = vector.broadcast %cst_77 : f32 to vector<8x32xf32>
    %375 = arith.addf %374, %373 : vector<8x32xf32>
    %376 = arith.divf %374, %375 : vector<8x32xf32>
    %377 = arith.mulf %368, %352 : vector<8x32xf32>
    %378 = arith.mulf %362, %370 : vector<8x32xf32>
    %379 = arith.addf %377, %378 : vector<8x32xf32>
    %380 = math.tanh %379 : vector<8x32xf32>
    %381 = arith.mulf %376, %380 : vector<8x32xf32>
    %cst_78 = arith.constant dense<0.000000e+00> : vector<8x128xf32>
    %382 = tpu.matmul %381, %2, %cst_78 {dimension_numbers = #tpu.dot_dimension_numbers<[1], [0], [0], [1], [0, 0, 1, 1], [], []>} : vector<8x32xf32>, vector<32x128xf32>, vector<8x128xf32> -> vector<8x128xf32>
    %383 = arith.addf %382, %20 : vector<8x128xf32>
    %384 = vector.extract_strided_slice %383 {offsets = [0, 0], sizes = [8, 32], strides = [1, 1]} : vector<8x128xf32> to vector<8x32xf32>
    %385 = arith.negf %384 : vector<8x32xf32>
    %386 = math.exp %385 : vector<8x32xf32>
    %cst_79 = arith.constant 1.000000e+00 : f32
    %387 = vector.broadcast %cst_79 : f32 to vector<8x32xf32>
    %388 = arith.addf %387, %386 : vector<8x32xf32>
    %389 = arith.divf %387, %388 : vector<8x32xf32>
    %390 = vector.extract_strided_slice %383 {offsets = [0, 32], sizes = [8, 32], strides = [1, 1]} : vector<8x128xf32> to vector<8x32xf32>
    %391 = arith.negf %390 : vector<8x32xf32>
    %392 = math.exp %391 : vector<8x32xf32>
    %cst_80 = arith.constant 1.000000e+00 : f32
    %393 = vector.broadcast %cst_80 : f32 to vector<8x32xf32>
    %394 = arith.addf %393, %392 : vector<8x32xf32>
    %395 = arith.divf %393, %394 : vector<8x32xf32>
    %396 = vector.extract_strided_slice %383 {offsets = [0, 64], sizes = [8, 32], strides = [1, 1]} : vector<8x128xf32> to vector<8x32xf32>
    %397 = math.tanh %396 : vector<8x32xf32>
    %398 = vector.extract_strided_slice %383 {offsets = [0, 96], sizes = [8, 32], strides = [1, 1]} : vector<8x128xf32> to vector<8x32xf32>
    %399 = arith.negf %398 : vector<8x32xf32>
    %400 = math.exp %399 : vector<8x32xf32>
    %cst_81 = arith.constant 1.000000e+00 : f32
    %401 = vector.broadcast %cst_81 : f32 to vector<8x32xf32>
    %402 = arith.addf %401, %400 : vector<8x32xf32>
    %403 = arith.divf %401, %402 : vector<8x32xf32>
    %404 = arith.mulf %395, %379 : vector<8x32xf32>
    %405 = arith.mulf %389, %397 : vector<8x32xf32>
    %406 = arith.addf %404, %405 : vector<8x32xf32>
    %407 = math.tanh %406 : vector<8x32xf32>
    %408 = arith.mulf %403, %407 : vector<8x32xf32>
    %cst_82 = arith.constant dense<0.000000e+00> : vector<8x128xf32>
    %409 = tpu.matmul %408, %2, %cst_82 {dimension_numbers = #tpu.dot_dimension_numbers<[1], [0], [0], [1], [0, 0, 1, 1], [], []>} : vector<8x32xf32>, vector<32x128xf32>, vector<8x128xf32> -> vector<8x128xf32>
    %410 = arith.addf %409, %20 : vector<8x128xf32>
    %411 = vector.extract_strided_slice %410 {offsets = [0, 0], sizes = [8, 32], strides = [1, 1]} : vector<8x128xf32> to vector<8x32xf32>
    %412 = arith.negf %411 : vector<8x32xf32>
    %413 = math.exp %412 : vector<8x32xf32>
    %cst_83 = arith.constant 1.000000e+00 : f32
    %414 = vector.broadcast %cst_83 : f32 to vector<8x32xf32>
    %415 = arith.addf %414, %413 : vector<8x32xf32>
    %416 = arith.divf %414, %415 : vector<8x32xf32>
    %417 = vector.extract_strided_slice %410 {offsets = [0, 32], sizes = [8, 32], strides = [1, 1]} : vector<8x128xf32> to vector<8x32xf32>
    %418 = arith.negf %417 : vector<8x32xf32>
    %419 = math.exp %418 : vector<8x32xf32>
    %cst_84 = arith.constant 1.000000e+00 : f32
    %420 = vector.broadcast %cst_84 : f32 to vector<8x32xf32>
    %421 = arith.addf %420, %419 : vector<8x32xf32>
    %422 = arith.divf %420, %421 : vector<8x32xf32>
    %423 = vector.extract_strided_slice %410 {offsets = [0, 64], sizes = [8, 32], strides = [1, 1]} : vector<8x128xf32> to vector<8x32xf32>
    %424 = math.tanh %423 : vector<8x32xf32>
    %425 = vector.extract_strided_slice %410 {offsets = [0, 96], sizes = [8, 32], strides = [1, 1]} : vector<8x128xf32> to vector<8x32xf32>
    %426 = arith.negf %425 : vector<8x32xf32>
    %427 = math.exp %426 : vector<8x32xf32>
    %cst_85 = arith.constant 1.000000e+00 : f32
    %428 = vector.broadcast %cst_85 : f32 to vector<8x32xf32>
    %429 = arith.addf %428, %427 : vector<8x32xf32>
    %430 = arith.divf %428, %429 : vector<8x32xf32>
    %431 = arith.mulf %422, %406 : vector<8x32xf32>
    %432 = arith.mulf %416, %424 : vector<8x32xf32>
    %433 = arith.addf %431, %432 : vector<8x32xf32>
    %434 = math.tanh %433 : vector<8x32xf32>
    %435 = arith.mulf %430, %434 : vector<8x32xf32>
    %cst_86 = arith.constant dense<0.000000e+00> : vector<8x128xf32>
    %436 = tpu.matmul %435, %2, %cst_86 {dimension_numbers = #tpu.dot_dimension_numbers<[1], [0], [0], [1], [0, 0, 1, 1], [], []>} : vector<8x32xf32>, vector<32x128xf32>, vector<8x128xf32> -> vector<8x128xf32>
    %437 = arith.addf %436, %20 : vector<8x128xf32>
    %438 = vector.extract_strided_slice %437 {offsets = [0, 0], sizes = [8, 32], strides = [1, 1]} : vector<8x128xf32> to vector<8x32xf32>
    %439 = arith.negf %438 : vector<8x32xf32>
    %440 = math.exp %439 : vector<8x32xf32>
    %cst_87 = arith.constant 1.000000e+00 : f32
    %441 = vector.broadcast %cst_87 : f32 to vector<8x32xf32>
    %442 = arith.addf %441, %440 : vector<8x32xf32>
    %443 = arith.divf %441, %442 : vector<8x32xf32>
    %444 = vector.extract_strided_slice %437 {offsets = [0, 32], sizes = [8, 32], strides = [1, 1]} : vector<8x128xf32> to vector<8x32xf32>
    %445 = arith.negf %444 : vector<8x32xf32>
    %446 = math.exp %445 : vector<8x32xf32>
    %cst_88 = arith.constant 1.000000e+00 : f32
    %447 = vector.broadcast %cst_88 : f32 to vector<8x32xf32>
    %448 = arith.addf %447, %446 : vector<8x32xf32>
    %449 = arith.divf %447, %448 : vector<8x32xf32>
    %450 = vector.extract_strided_slice %437 {offsets = [0, 64], sizes = [8, 32], strides = [1, 1]} : vector<8x128xf32> to vector<8x32xf32>
    %451 = math.tanh %450 : vector<8x32xf32>
    %452 = vector.extract_strided_slice %437 {offsets = [0, 96], sizes = [8, 32], strides = [1, 1]} : vector<8x128xf32> to vector<8x32xf32>
    %453 = arith.negf %452 : vector<8x32xf32>
    %454 = math.exp %453 : vector<8x32xf32>
    %cst_89 = arith.constant 1.000000e+00 : f32
    %455 = vector.broadcast %cst_89 : f32 to vector<8x32xf32>
    %456 = arith.addf %455, %454 : vector<8x32xf32>
    %457 = arith.divf %455, %456 : vector<8x32xf32>
    %458 = arith.mulf %449, %433 : vector<8x32xf32>
    %459 = arith.mulf %443, %451 : vector<8x32xf32>
    %460 = arith.addf %458, %459 : vector<8x32xf32>
    %461 = math.tanh %460 : vector<8x32xf32>
    %462 = arith.mulf %457, %461 : vector<8x32xf32>
    %463 = tpu.concatenate %273, %300, %327, %354, %381, %408, %435, %462 in 0 : vector<8x32xf32>, vector<8x32xf32>, vector<8x32xf32>, vector<8x32xf32>, vector<8x32xf32>, vector<8x32xf32>, vector<8x32xf32>, vector<8x32xf32> -> vector<64x32xf32>
    %cst_90 = arith.constant dense<0.000000e+00> : vector<64x8xf32>
    %464 = tpu.matmul %463, %3, %cst_90 {dimension_numbers = #tpu.dot_dimension_numbers<[1], [0], [0], [1], [0, 0, 1, 1], [], []>} : vector<64x32xf32>, vector<32x8xf32>, vector<64x8xf32> -> vector<64x8xf32>
    %c0_91 = arith.constant 0 : index
    %c0_92 = arith.constant 0 : index
    %465 = vector.load %arg10[%c0_91, %c0_92] : memref<1x8xf32, #tpu.memory_space<vmem>>, vector<1x8xf32>
    %466 = vector.broadcast %465 : vector<1x8xf32> to vector<64x8xf32>
    %467 = arith.addf %464, %466 : vector<64x8xf32>
    %c0_93 = arith.constant 0 : index
    %c0_94 = arith.constant 0 : index
    %468 = vector.load %arg11[%c0_93, %c0_94] : memref<64x8xf32, #tpu.memory_space<vmem>>, vector<64x8xf32>
    tpu.vector_store %arg11[%c0_93, %c0_94], %467 {strides = array<i32>} : memref<64x8xf32, #tpu.memory_space<vmem>>, vector<64x8xf32>,
    return
  }
}

</mosaic_0001>

<llo_original>
// kernel: seq2seq_forward.1
$region0: #{seq2seq_forward.1}
  #allocation0 [shape = 'u32[]', space=smem, size = 0x4, offset = 0x4, fixed_abs, tag = 'smem constant byte address 0x4 - core index']
  #allocation1 [shape = 'u32[144,128]{1,0:T(1,128)}', space=vmem, size = 0x12000, scoped, tag = 'internal scratch']
  %s0 = inlined_call_operand.vmem [shape: f32[8,8,8], index: 0, kind: input, shape index: {}]
  %s1 = inlined_call_operand.vmem [shape: f32[8,128], index: 1, kind: input, shape index: {}]
  %s2 = inlined_call_operand.vmem [shape: f32[32,128], index: 2, kind: input, shape index: {}]
  %s3 = inlined_call_operand.vmem [shape: f32[1,128], index: 3, kind: input, shape index: {}]
  %s4 = inlined_call_operand.vmem [shape: f32[8,128], index: 4, kind: input, shape index: {}]
  %s5 = inlined_call_operand.vmem [shape: f32[32,128], index: 5, kind: input, shape index: {}]
  %s6 = inlined_call_operand.vmem [shape: f32[1,128], index: 6, kind: input, shape index: {}]
  %s7 = inlined_call_operand.vmem [shape: f32[32,128], index: 7, kind: input, shape index: {}]
  %s8 = inlined_call_operand.vmem [shape: f32[1,128], index: 8, kind: input, shape index: {}]
  %s9 = inlined_call_operand.vmem [shape: f32[32,8], index: 9, kind: input, shape index: {}]
  %s10 = inlined_call_operand.vmem [shape: f32[1,8], index: 10, kind: input, shape index: {}]
  %s11 = inlined_call_operand.vmem [shape: f32[64,8], index: 11, kind: output, shape index: {}]
  %s12 = sld [smem:[#allocation0]]
  $region54: #{seq2seq_forward.1} parent=0
    _
  %s14 = ssub.s32 1, %s12
  %s15 = scalar_select 0, %s14, %s12
  // Predicated region
  $region2: #{seq2seq_forward.1} parent=0 // pred_check
    _
  $region3: #{seq2seq_forward.1} parent=0 // pred_check_branch
    %17 = sbr.rel (0) target = $region5
  $region4: #{seq2seq_forward.1} parent=0 // pred_region
    _
  $region5: #{seq2seq_forward.1} parent=0 // pred_fallthru
    _
  // Predicated region
  $region6: #{seq2seq_forward.1} parent=0 // pred_check
    _
  $region7: #{seq2seq_forward.1} parent=0 // pred_check_branch
    %19 = sbr.rel (0) target = $region9
  $region8: #{seq2seq_forward.1} parent=0 // pred_region
    _
  $region9: #{seq2seq_forward.1} parent=0 // pred_fallthru
    _
  // Predicated region
  $region10: #{seq2seq_forward.1} parent=0 // pred_check
    _
  $region11: #{seq2seq_forward.1} parent=0 // pred_check_branch
    %21 = sbr.rel (0) target = $region13
  $region12: #{seq2seq_forward.1} parent=0 // pred_region
    _
  $region13: #{seq2seq_forward.1} parent=0 // pred_fallthru
    _
  // Predicated region
  $region14: #{seq2seq_forward.1} parent=0 // pred_check
    _
  $region15: #{seq2seq_forward.1} parent=0 // pred_check_branch
    %23 = sbr.rel (0) target = $region17
  $region16: #{seq2seq_forward.1} parent=0 // pred_region
    _
  $region17: #{seq2seq_forward.1} parent=0 // pred_fallthru
    _
  // Predicated region
  $region18: #{seq2seq_forward.1} parent=0 // pred_check
    _
  $region19: #{seq2seq_forward.1} parent=0 // pred_check_branch
    %25 = sbr.rel (0) target = $region21
  $region20: #{seq2seq_forward.1} parent=0 // pred_region
    _
  $region21: #{seq2seq_forward.1} parent=0 // pred_fallthru
    _
  // Predicated region
  $region22: #{seq2seq_forward.1} parent=0 // pred_check
    _
  $region23: #{seq2seq_forward.1} parent=0 // pred_check_branch
    %27 = sbr.rel (0) target = $region25
  $region24: #{seq2seq_forward.1} parent=0 // pred_region
    _
  $region25: #{seq2seq_forward.1} parent=0 // pred_fallthru
    _
  // Predicated region
  $region26: #{seq2seq_forward.1} parent=0 // pred_check
    _
  $region27: #{seq2seq_forward.1} parent=0 // pred_check_branch
    %29 = sbr.rel (0) target = $region29
  $region28: #{seq2seq_forward.1} parent=0 // pred_region
    _
  $region29: #{seq2seq_forward.1} parent=0 // pred_fallthru
    _
  // Predicated region
  $region30: #{seq2seq_forward.1} parent=0 // pred_check
    _
  $region31: #{seq2seq_forward.1} parent=0 // pred_check_branch
    %31 = sbr.rel (0) target = $region33
  $region32: #{seq2seq_forward.1} parent=0 // pred_region
    _
  $region33: #{seq2seq_forward.1} parent=0 // pred_fallthru
    _
  // Predicated region
  $region34: #{seq2seq_forward.1} parent=0 // pred_check
    _
  $region35: #{seq2seq_forward.1} parent=0 // pred_check_branch
    %33 = sbr.rel (0) target = $region37
  $region36: #{seq2seq_forward.1} parent=0 // pred_region
    _
  $region37: #{seq2seq_forward.1} parent=0 // pred_fallthru
    _
  // Predicated region
  $region38: #{seq2seq_forward.1} parent=0 // pred_check
    _
  $region39: #{seq2seq_forward.1} parent=0 // pred_check_branch
    %35 = sbr.rel (0) target = $region41
  $region40: #{seq2seq_forward.1} parent=0 // pred_region
    _
  $region41: #{seq2seq_forward.1} parent=0 // pred_fallthru
    _
  // Predicated region
  $region42: #{seq2seq_forward.1} parent=0 // pred_check
    _
  $region43: #{seq2seq_forward.1} parent=0 // pred_check_branch
    %37 = sbr.rel (0) target = $region45
  $region44: #{seq2seq_forward.1} parent=0 // pred_region
    _
  $region45: #{seq2seq_forward.1} parent=0 // pred_fallthru
    _
  %v38 = vld [vmem:[%s2] sm:$0xff]
  %v39 = vld [vmem:[%s2 + $0x8] sm:$0xff]
  %v40 = vld [vmem:[%s2 + $0x10] sm:$0xff]
  %v41 = vld [vmem:[%s2 + $0x18] sm:$0xff]
  %v42 = vld [vmem:[%s5] sm:$0xff]
  %v43 = vld [vmem:[%s5 + $0x8] sm:$0xff]
  %v44 = vld [vmem:[%s5 + $0x10] sm:$0xff]
  %v45 = vld [vmem:[%s5 + $0x18] sm:$0xff]
  %v46 = vld [vmem:[%s7] sm:$0xff]
  %v47 = vld [vmem:[%s7 + $0x8] sm:$0xff]
  %v48 = vld [vmem:[%s7 + $0x10] sm:$0xff]
  %v49 = vld [vmem:[%s7 + $0x18] sm:$0xff]
  %v50 = vld [vmem:[%s9] sm:$0xff]
  %v51 = vld [vmem:[%s9 + $0x8] sm:$0xff]
  %v52 = vld [vmem:[%s9 + $0x10] sm:$0xff]
  %v53 = vld [vmem:[%s9 + $0x18] sm:$0xff]
  %v54 = vld [vmem:[%s0] sm:$0xff]
  %v55 = vld [vmem:[%s0 + $0x8] sm:$0xff]
  %v56 = vld [vmem:[%s0 + $0x10] sm:$0xff]
  %v57 = vld [vmem:[%s0 + $0x18] sm:$0xff]
  %v58 = vld [vmem:[%s0 + $0x20] sm:$0xff]
  %v59 = vld [vmem:[%s0 + $0x28] sm:$0xff]
  %v60 = vld [vmem:[%s0 + $0x30] sm:$0xff]
  %v61 = vld [vmem:[%s0 + $0x38] sm:$0xff]
  %v62 = vld [vmem:[%s1] sm:$0xff]
  %v63 = vld [vmem:[%s3] sm:$0x1]
  %v65 = vlaneseq
  %v66 = vshrl.u32 %v65, 7
  %v67 = vsub.s32 0, %v66
  %v68 = vrot.slane %v63, %v67
  %vm70 = vcmask 64512
  %v72 = vsel %vm70, %v54, 0
  %v75 = vsel %vm70, %v55, 0
  %v78 = vsel %vm70, %v56, 0
  %v81 = vsel %vm70, %v57, 0
  %v84 = vsel %vm70, %v58, 0
  %v87 = vsel %vm70, %v59, 0
  %v90 = vsel %vm70, %v60, 0
  %v93 = vsel %vm70, %v61, 0
  %95 = vmatprep.subr.mxu0 0.0
  %96 = vmatpush1.msra.mxu0 %v62
  %97 = vmatprep.subr.mxu0 0.0
  %98 = vmatpush1.msra.mxu0 0.0
  %99 = vmatprep.subr.mxu0 0.0
  %100 = vmatpush1.msra.mxu0 0.0
  %101 = vmatprep.subr.mxu0 0.0
  %102 = vmatpush1.msra.mxu0 0.0
  %103 = vmatprep.subr.mxu0 0.0
  %104 = vmatpush1.msra.mxu0 0.0
  %105 = vmatprep.subr.mxu0 0.0
  %106 = vmatpush1.msra.mxu0 0.0
  %107 = vmatprep.subr.mxu0 0.0
  %108 = vmatpush1.msra.mxu0 0.0
  %109 = vmatprep.subr.mxu0 0.0
  %110 = vmatpush1.msra.mxu0 0.0
  %111 = vmatprep.subr.mxu0 0.0
  %112 = vmatpush1.msra.mxu0 0.0
  %113 = vmatprep.subr.mxu0 0.0
  %114 = vmatpush1.msra.mxu0 0.0
  %115 = vmatprep.subr.mxu0 0.0
  %116 = vmatpush1.msra.mxu0 0.0
  %117 = vmatprep.subr.mxu0 0.0
  %118 = vmatpush1.msra.mxu0 0.0
  %119 = vmatprep.subr.mxu0 0.0
  %120 = vmatpush1.msra.mxu0 0.0
  %121 = vmatprep.subr.mxu0 0.0
  %122 = vmatpush1.msra.mxu0 0.0
  %123 = vmatprep.subr.mxu0 0.0
  %124 = vmatpush1.msra.mxu0 0.0
  %125 = vmatprep.subr.mxu0 0.0
  %126 = vmatpush1.msra.mxu0 0.0
  %127 = vmatprep.subr.mxu0 0.0
  %128 = vmatpush1.msra.mxu0 0.0
  %129 = vmatprep.subr.mxu0 0.0
  %130 = vmatpush1.msra.mxu0 0.0
  %131 = vmatprep.subr.mxu0 0.0
  %132 = vmatpush1.msra.mxu0 0.0
  %133 = vmatprep.subr.mxu0 0.0
  %134 = vmatpush1.msra.mxu0 0.0
  %135 = vmatprep.subr.mxu0 0.0
  %136 = vmatpush1.msra.mxu0 0.0
  %137 = vmatprep.subr.mxu0 0.0
  %138 = vmatpush1.msra.mxu0 0.0
  %139 = vmatprep.subr.mxu0 0.0
  %140 = vmatpush1.msra.mxu0 0.0
  %141 = vmatprep.subr.mxu0 0.0
  %142 = vmatpush1.msra.mxu0 0.0
  %143 = vmatprep.subr.mxu0 0.0
  %144 = vmatpush1.msra.mxu0 0.0
  %145 = vmatprep.subr.mxu0 0.0
  %146 = vmatpush1.msra.mxu0 0.0
  %147 = vmatprep.subr.mxu0 0.0
  %148 = vmatpush1.msra.mxu0 0.0
  %149 = vmatprep.subr.mxu0 0.0
  %150 = vmatpush1.msra.mxu0 0.0
  %151 = vmatprep.subr.mxu0 0.0
  %152 = vmatpush1.msra.mxu0 0.0
  %153 = vmatprep.subr.mxu0 0.0
  %154 = vmatpush1.msra.mxu0 0.0
  %155 = vmatprep.subr.mxu0 0.0
  %156 = vmatpush1.msra.mxu0 0.0
  %157 = vmatprep.subr.mxu0 0.0
  %158 = vmatpush1.msra.mxu0 0.0
  %159 = vmatprep.mubr.f32.mxu0 0.0
  %160 = vmatmul.mubr.f32.gmra.mrb[0].mxu0 %v72
  %v161 = vpop.f32.mrb[0].mxu0
  %v162 = vadd.f32 %v68, %v161
  %v163 = vpop.f32.mrb[0].mxu0
  %164 = vmatprep.mubr.f32.mxu0 0.0
  %165 = vmatmul.mubr.f32.gmra.mrb[0].mxu0 %v75
  %v166 = vpop.f32.mrb[0].mxu0
  %v167 = vadd.f32 %v68, %v166
  %v168 = vpop.f32.mrb[0].mxu0
  %169 = vmatprep.mubr.f32.mxu0 0.0
  %170 = vmatmul.mubr.f32.gmra.mrb[0].mxu0 %v78
  %v171 = vpop.f32.mrb[0].mxu0
  %v172 = vadd.f32 %v68, %v171
  %v173 = vpop.f32.mrb[0].mxu0
  %174 = vmatprep.mubr.f32.mxu0 0.0
  %175 = vmatmul.mubr.f32.gmra.mrb[0].mxu0 %v81
  %v176 = vpop.f32.mrb[0].mxu0
  %v177 = vadd.f32 %v68, %v176
  %v178 = vpop.f32.mrb[0].mxu0
  %179 = vmatprep.mubr.f32.mxu0 0.0
  %180 = vmatmul.mubr.f32.gmra.mrb[0].mxu0 %v84
  %v181 = vpop.f32.mrb[0].mxu0
  %v182 = vadd.f32 %v68, %v181
  %v183 = vpop.f32.mrb[0].mxu0
  %184 = vmatprep.mubr.f32.mxu0 0.0
  %185 = vmatmul.mubr.f32.gmra.mrb[0].mxu0 %v87
  %v186 = vpop.f32.mrb[0].mxu0
  %v187 = vadd.f32 %v68, %v186
  %v188 = vpop.f32.mrb[0].mxu0
  %189 = vmatprep.mubr.f32.mxu0 0.0
  %190 = vmatmul.mubr.f32.gmra.mrb[0].mxu0 %v90
  %v191 = vpop.f32.mrb[0].mxu0
  %v192 = vadd.f32 %v68, %v191
  %v193 = vpop.f32.mrb[0].mxu0
  %194 = vmatprep.mubr.f32.mxu0 0.0
  %195 = vmatmul.mubr.f32.gmra.mrb[0].mxu0 %v93
  %v196 = vpop.f32.mrb[0].mxu0
  %v197 = vadd.f32 %v68, %v196
  %v198 = vpop.f32.mrb[0].mxu0
  %199 = vdwg.mxu0
  %v200 = vld [vmem:[%s0] sm:$0xff]
  %v201 = vld [vmem:[%s4] sm:$0xff]
  %v202 = vld [vmem:[%s6] sm:$0x1]
  %v204 = vlaneseq
  %v205 = vshrl.u32 %v204, 7
  %v206 = vsub.s32 0, %v205
  %v207 = vrot.slane %v202, %v206
  %v210 = vsel %vm70, %v200, 0
  %212 = vmatprep.subr.mxu0 0.0
  %213 = vmatpush1.msra.mxu0 %v201
  %214 = vmatprep.subr.mxu0 0.0
  %215 = vmatpush1.msra.mxu0 0.0
  %216 = vmatprep.subr.mxu0 0.0
  %217 = vmatpush1.msra.mxu0 0.0
  %218 = vmatprep.subr.mxu0 0.0
  %219 = vmatpush1.msra.mxu0 0.0
  %220 = vmatprep.subr.mxu0 0.0
  %221 = vmatpush1.msra.mxu0 0.0
  %222 = vmatprep.subr.mxu0 0.0
  %223 = vmatpush1.msra.mxu0 0.0
  %224 = vmatprep.subr.mxu0 0.0
  %225 = vmatpush1.msra.mxu0 0.0
  %226 = vmatprep.subr.mxu0 0.0
  %227 = vmatpush1.msra.mxu0 0.0
  %228 = vmatprep.subr.mxu0 0.0
  %229 = vmatpush1.msra.mxu0 0.0
  %230 = vmatprep.subr.mxu0 0.0
  %231 = vmatpush1.msra.mxu0 0.0
  %232 = vmatprep.subr.mxu0 0.0
  %233 = vmatpush1.msra.mxu0 0.0
  %234 = vmatprep.subr.mxu0 0.0
  %235 = vmatpush1.msra.mxu0 0.0
  %236 = vmatprep.subr.mxu0 0.0
  %237 = vmatpush1.msra.mxu0 0.0
  %238 = vmatprep.subr.mxu0 0.0
  %239 = vmatpush1.msra.mxu0 0.0
  %240 = vmatprep.subr.mxu0 0.0
  %241 = vmatpush1.msra.mxu0 0.0
  %242 = vmatprep.subr.mxu0 0.0
  %243 = vmatpush1.msra.mxu0 0.0
  %244 = vmatprep.subr.mxu0 0.0
  %245 = vmatpush1.msra.mxu0 0.0
  %246 = vmatprep.subr.mxu0 0.0
  %247 = vmatpush1.msra.mxu0 0.0
  %248 = vmatprep.subr.mxu0 0.0
  %249 = vmatpush1.msra.mxu0 0.0
  %250 = vmatprep.subr.mxu0 0.0
  %251 = vmatpush1.msra.mxu0 0.0
  %252 = vmatprep.subr.mxu0 0.0
  %253 = vmatpush1.msra.mxu0 0.0
  %254 = vmatprep.subr.mxu0 0.0
  %255 = vmatpush1.msra.mxu0 0.0
  %256 = vmatprep.subr.mxu0 0.0
  %257 = vmatpush1.msra.mxu0 0.0
  %258 = vmatprep.subr.mxu0 0.0
  %259 = vmatpush1.msra.mxu0 0.0
  %260 = vmatprep.subr.mxu0 0.0
  %261 = vmatpush1.msra.mxu0 0.0
  %262 = vmatprep.subr.mxu0 0.0
  %263 = vmatpush1.msra.mxu0 0.0
  %264 = vmatprep.subr.mxu0 0.0
  %265 = vmatpush1.msra.mxu0 0.0
  %266 = vmatprep.subr.mxu0 0.0
  %267 = vmatpush1.msra.mxu0 0.0
  %268 = vmatprep.subr.mxu0 0.0
  %269 = vmatpush1.msra.mxu0 0.0
  %270 = vmatprep.subr.mxu0 0.0
  %271 = vmatpush1.msra.mxu0 0.0
  %272 = vmatprep.subr.mxu0 0.0
  %273 = vmatpush1.msra.mxu0 0.0
  %274 = vmatprep.subr.mxu0 0.0
  %275 = vmatpush1.msra.mxu0 0.0
  %276 = vmatprep.mubr.f32.mxu0 0.0
  %277 = vmatmul.mubr.f32.gmra.mrb[0].mxu0 %v210
  %v278 = vpop.f32.mrb[0].mxu0
  %v279 = vadd.f32 %v207, %v278
  %v280 = vpop.f32.mrb[0].mxu0
  %281 = vdwg.mxu0
  %v282 = vld [vmem:[%s8] sm:$0x1]
  %v284 = vlaneseq
  %v285 = vshrl.u32 %v284, 7
  %v286 = vsub.s32 0, %v285
  %v287 = vrot.slane %v282, %v286
  %vm289 = vcmask 261120
  %v291 = vsel %vm289, 0.0, 0
  %293 = vmatprep.subr.mxu0 0.0
  %294 = vmatpush1.msra.mxu0 %v38
  %295 = vmatprep.subr.mxu0 0.0
  %296 = vmatpush1.msra.mxu0 %v39
  %297 = vmatprep.subr.mxu0 0.0
  %298 = vmatpush1.msra.mxu0 %v40
  %299 = vmatprep.subr.mxu0 0.0
  %300 = vmatpush1.msra.mxu0 %v41
  %301 = vmatprep.subr.mxu0 0.0
  %302 = vmatpush1.msra.mxu0 0.0
  %303 = vmatprep.subr.mxu0 0.0
  %304 = vmatpush1.msra.mxu0 0.0
  %305 = vmatprep.subr.mxu0 0.0
  %306 = vmatpush1.msra.mxu0 0.0
  %307 = vmatprep.subr.mxu0 0.0
  %308 = vmatpush1.msra.mxu0 0.0
  %309 = vmatprep.subr.mxu0 0.0
  %310 = vmatpush1.msra.mxu0 0.0
  %311 = vmatprep.subr.mxu0 0.0
  %312 = vmatpush1.msra.mxu0 0.0
  %313 = vmatprep.subr.mxu0 0.0
  %314 = vmatpush1.msra.mxu0 0.0
  %315 = vmatprep.subr.mxu0 0.0
  %316 = vmatpush1.msra.mxu0 0.0
  %317 = vmatprep.subr.mxu0 0.0
  %318 = vmatpush1.msra.mxu0 0.0
  %319 = vmatprep.subr.mxu0 0.0
  %320 = vmatpush1.msra.mxu0 0.0
  %321 = vmatprep.subr.mxu0 0.0
  %322 = vmatpush1.msra.mxu0 0.0
  %323 = vmatprep.subr.mxu0 0.0
  %324 = vmatpush1.msra.mxu0 0.0
  %325 = vmatprep.subr.mxu0 0.0
  %326 = vmatpush1.msra.mxu0 0.0
  %327 = vmatprep.subr.mxu0 0.0
  %328 = vmatpush1.msra.mxu0 0.0
  %329 = vmatprep.subr.mxu0 0.0
  %330 = vmatpush1.msra.mxu0 0.0
  %331 = vmatprep.subr.mxu0 0.0
  %332 = vmatpush1.msra.mxu0 0.0
  %333 = vmatprep.subr.mxu0 0.0
  %334 = vmatpush1.msra.mxu0 0.0
  %335 = vmatprep.subr.mxu0 0.0
  %336 = vmatpush1.msra.mxu0 0.0
  %337 = vmatprep.subr.mxu0 0.0
  %338 = vmatpush1.msra.mxu0 0.0
  %339 = vmatprep.subr.mxu0 0.0
  %340 = vmatpush1.msra.mxu0 0.0
  %341 = vmatprep.subr.mxu0 0.0
  %342 = vmatpush1.msra.mxu0 0.0
  %343 = vmatprep.subr.mxu0 0.0
  %344 = vmatpush1.msra.mxu0 0.0
  %345 = vmatprep.subr.mxu0 0.0
  %346 = vmatpush1.msra.mxu0 0.0
  %347 = vmatprep.subr.mxu0 0.0
  %348 = vmatpush1.msra.mxu0 0.0
  %349 = vmatprep.subr.mxu0 0.0
  %350 = vmatpush1.msra.mxu0 0.0
  %351 = vmatprep.subr.mxu0 0.0
  %352 = vmatpush1.msra.mxu0 0.0
  %353 = vmatprep.subr.mxu0 0.0
  %354 = vmatpush1.msra.mxu0 0.0
  %355 = vmatprep.subr.mxu0 0.0
  %356 = vmatpush1.msra.mxu0 0.0
  %357 = vmatprep.mubr.f32.mxu0 0.0
  %358 = vmatmul.mubr.f32.gmra.mrb[0].mxu0 %v291
  %v359 = vpop.f32.mrb[0].mxu0
  %v360 = vadd.f32 0.0, %v359
  %v361 = vpop.f32.mrb[0].mxu0
  %362 = vdwg.mxu0
  %v363 = vadd.f32 %v162, %v360
  %v364 = vxor.u32 %v363, 2147483648
  %v365 = vmul.f32 %v364, 1.442695
  %v366 = vpow.pop %v365
  %v367 = vadd.f32 %v366, 1.0
  %v368 = vrcp.pop %v367
  %v369 = vmul.f32 1.0, %v368
  %v370 = vtanh.pop %v363
  %v371 = vmul.f32 %v369, 0.0
  %373 = vrot.lane.b32.xlu0 %v370, 64
  %v374 = vpop.permute.xlu0 %373
  %v376 = vmul.f32 %v369, %v374
  %378 = vrot.lane.b32.xlu0 %v376, 32
  %v379 = vpop.permute.xlu0 %378
  %v381 = vadd.f32 %v371, %v379
  %v382 = vtanh.pop %v381
  %384 = vrot.lane.b32.xlu0 %v382, 64
  %v385 = vpop.permute.xlu0 %384
  %v387 = vmul.f32 %v369, %v385
  %389 = vrot.lane.b32.xlu0 %v387, 32
  %v390 = vpop.permute.xlu0 %389
  %v391 = vsel %vm289, %v390, 0
  %393 = vmatprep.subr.mxu0 0.0
  %394 = vmatpush1.msra.mxu0 %v38
  %395 = vmatprep.subr.mxu0 0.0
  %396 = vmatpush1.msra.mxu0 %v39
  %397 = vmatprep.subr.mxu0 0.0
  %398 = vmatpush1.msra.mxu0 %v40
  %399 = vmatprep.subr.mxu0 0.0
  %400 = vmatpush1.msra.mxu0 %v41
  %401 = vmatprep.subr.mxu0 0.0
  %402 = vmatpush1.msra.mxu0 0.0
  %403 = vmatprep.subr.mxu0 0.0
  %404 = vmatpush1.msra.mxu0 0.0
  %405 = vmatprep.subr.mxu0 0.0
  %406 = vmatpush1.msra.mxu0 0.0
  %407 = vmatprep.subr.mxu0 0.0
  %408 = vmatpush1.msra.mxu0 0.0
  %409 = vmatprep.subr.mxu0 0.0
  %410 = vmatpush1.msra.mxu0 0.0
  %411 = vmatprep.subr.mxu0 0.0
  %412 = vmatpush1.msra.mxu0 0.0
  %413 = vmatprep.subr.mxu0 0.0
  %414 = vmatpush1.msra.mxu0 0.0
  %415 = vmatprep.subr.mxu0 0.0
  %416 = vmatpush1.msra.mxu0 0.0
  %417 = vmatprep.subr.mxu0 0.0
  %418 = vmatpush1.msra.mxu0 0.0
  %419 = vmatprep.subr.mxu0 0.0
  %420 = vmatpush1.msra.mxu0 0.0
  %421 = vmatprep.subr.mxu0 0.0
  %422 = vmatpush1.msra.mxu0 0.0
  %423 = vmatprep.subr.mxu0 0.0
  %424 = vmatpush1.msra.mxu0 0.0
  %425 = vmatprep.subr.mxu0 0.0
  %426 = vmatpush1.msra.mxu0 0.0
  %427 = vmatprep.subr.mxu0 0.0
  %428 = vmatpush1.msra.mxu0 0.0
  %429 = vmatprep.subr.mxu0 0.0
  %430 = vmatpush1.msra.mxu0 0.0
  %431 = vmatprep.subr.mxu0 0.0
  %432 = vmatpush1.msra.mxu0 0.0
  %433 = vmatprep.subr.mxu0 0.0
  %434 = vmatpush1.msra.mxu0 0.0
  %435 = vmatprep.subr.mxu0 0.0
  %436 = vmatpush1.msra.mxu0 0.0
  %437 = vmatprep.subr.mxu0 0.0
  %438 = vmatpush1.msra.mxu0 0.0
  %439 = vmatprep.subr.mxu0 0.0
  %440 = vmatpush1.msra.mxu0 0.0
  %441 = vmatprep.subr.mxu0 0.0
  %442 = vmatpush1.msra.mxu0 0.0
  %443 = vmatprep.subr.mxu0 0.0
  %444 = vmatpush1.msra.mxu0 0.0
  %445 = vmatprep.subr.mxu0 0.0
  %446 = vmatpush1.msra.mxu0 0.0
  %447 = vmatprep.subr.mxu0 0.0
  %448 = vmatpush1.msra.mxu0 0.0
  %449 = vmatprep.subr.mxu0 0.0
  %450 = vmatpush1.msra.mxu0 0.0
  %451 = vmatprep.subr.mxu0 0.0
  %452 = vmatpush1.msra.mxu0 0.0
  %453 = vmatprep.subr.mxu0 0.0
  %454 = vmatpush1.msra.mxu0 0.0
  %455 = vmatprep.subr.mxu0 0.0
  %456 = vmatpush1.msra.mxu0 0.0
  %457 = vmatprep.mubr.f32.mxu0 0.0
  %458 = vmatmul.mubr.f32.gmra.mrb[0].mxu0 %v391
  %v459 = vpop.f32.mrb[0].mxu0
  %v460 = vadd.f32 0.0, %v459
  %v461 = vpop.f32.mrb[0].mxu0
  %462 = vdwg.mxu0
  %v463 = vadd.f32 %v167, %v460
  %v464 = vxor.u32 %v463, 2147483648
  %v465 = vmul.f32 %v464, 1.442695
  %v466 = vpow.pop %v465
  %v467 = vadd.f32 %v466, 1.0
  %v468 = vrcp.pop %v467
  %v469 = vmul.f32 1.0, %v468
  %v470 = vtanh.pop %v463
  %v471 = vmul.f32 %v469, %v381
  %473 = vrot.lane.b32.xlu0 %v470, 64
  %v474 = vpop.permute.xlu0 %473
  %v476 = vmul.f32 %v469, %v474
  %478 = vrot.lane.b32.xlu0 %v476, 32
  %v479 = vpop.permute.xlu0 %478
  %v481 = vadd.f32 %v471, %v479
  %v482 = vtanh.pop %v481
  %484 = vrot.lane.b32.xlu0 %v482, 64
  %v485 = vpop.permute.xlu0 %484
  %v487 = vmul.f32 %v469, %v485
  %489 = vrot.lane.b32.xlu0 %v487, 32
  %v490 = vpop.permute.xlu0 %489
  %v491 = vsel %vm289, %v490, 0
  %493 = vmatprep.subr.mxu0 0.0
  %494 = vmatpush1.msra.mxu0 %v38
  %495 = vmatprep.subr.mxu0 0.0
  %496 = vmatpush1.msra.mxu0 %v39
  %497 = vmatprep.subr.mxu0 0.0
  %498 = vmatpush1.msra.mxu0 %v40
  %499 = vmatprep.subr.mxu0 0.0
  %500 = vmatpush1.msra.mxu0 %v41
  %501 = vmatprep.subr.mxu0 0.0
  %502 = vmatpush1.msra.mxu0 0.0
  %503 = vmatprep.subr.mxu0 0.0
  %504 = vmatpush1.msra.mxu0 0.0
  %505 = vmatprep.subr.mxu0 0.0
  %506 = vmatpush1.msra.mxu0 0.0
  %507 = vmatprep.subr.mxu0 0.0
  %508 = vmatpush1.msra.mxu0 0.0
  %509 = vmatprep.subr.mxu0 0.0
  %510 = vmatpush1.msra.mxu0 0.0
  %511 = vmatprep.subr.mxu0 0.0
  %512 = vmatpush1.msra.mxu0 0.0
  %513 = vmatprep.subr.mxu0 0.0
  %514 = vmatpush1.msra.mxu0 0.0
  %515 = vmatprep.subr.mxu0 0.0
  %516 = vmatpush1.msra.mxu0 0.0
  %517 = vmatprep.subr.mxu0 0.0
  %518 = vmatpush1.msra.mxu0 0.0
  %519 = vmatprep.subr.mxu0 0.0
  %520 = vmatpush1.msra.mxu0 0.0
  %521 = vmatprep.subr.mxu0 0.0
  %522 = vmatpush1.msra.mxu0 0.0
  %523 = vmatprep.subr.mxu0 0.0
  %524 = vmatpush1.msra.mxu0 0.0
  %525 = vmatprep.subr.mxu0 0.0
  %526 = vmatpush1.msra.mxu0 0.0
  %527 = vmatprep.subr.mxu0 0.0
  %528 = vmatpush1.msra.mxu0 0.0
  %529 = vmatprep.subr.mxu0 0.0
  %530 = vmatpush1.msra.mxu0 0.0
  %531 = vmatprep.subr.mxu0 0.0
  %532 = vmatpush1.msra.mxu0 0.0
  %533 = vmatprep.subr.mxu0 0.0
  %534 = vmatpush1.msra.mxu0 0.0
  %535 = vmatprep.subr.mxu0 0.0
  %536 = vmatpush1.msra.mxu0 0.0
  %537 = vmatprep.subr.mxu0 0.0
  %538 = vmatpush1.msra.mxu0 0.0
  %539 = vmatprep.subr.mxu0 0.0
  %540 = vmatpush1.msra.mxu0 0.0
  %541 = vmatprep.subr.mxu0 0.0
  %542 = vmatpush1.msra.mxu0 0.0
  %543 = vmatprep.subr.mxu0 0.0
  %544 = vmatpush1.msra.mxu0 0.0
  %545 = vmatprep.subr.mxu0 0.0
  %546 = vmatpush1.msra.mxu0 0.0
  %547 = vmatprep.subr.mxu0 0.0
  %548 = vmatpush1.msra.mxu0 0.0
  %549 = vmatprep.subr.mxu0 0.0
  %550 = vmatpush1.msra.mxu0 0.0
  %551 = vmatprep.subr.mxu0 0.0
  %552 = vmatpush1.msra.mxu0 0.0
  %553 = vmatprep.subr.mxu0 0.0
  %554 = vmatpush1.msra.mxu0 0.0
  %555 = vmatprep.subr.mxu0 0.0
  %556 = vmatpush1.msra.mxu0 0.0
  %557 = vmatprep.mubr.f32.mxu0 0.0
  %558 = vmatmul.mubr.f32.gmra.mrb[0].mxu0 %v491
  %v559 = vpop.f32.mrb[0].mxu0
  %v560 = vadd.f32 0.0, %v559
  %v561 = vpop.f32.mrb[0].mxu0
  %562 = vdwg.mxu0
  %v563 = vadd.f32 %v172, %v560
  %v564 = vxor.u32 %v563, 2147483648
  %v565 = vmul.f32 %v564, 1.442695
  %v566 = vpow.pop %v565
  %v567 = vadd.f32 %v566, 1.0
  %v568 = vrcp.pop %v567
  %v569 = vmul.f32 1.0, %v568
  %v570 = vtanh.pop %v563
  %v571 = vmul.f32 %v569, %v481
  %573 = vrot.lane.b32.xlu0 %v570, 64
  %v574 = vpop.permute.xlu0 %573
  %v576 = vmul.f32 %v569, %v574
  %578 = vrot.lane.b32.xlu0 %v576, 32
  %v579 = vpop.permute.xlu0 %578
  %v581 = vadd.f32 %v571, %v579
  %v582 = vtanh.pop %v581
  %584 = vrot.lane.b32.xlu0 %v582, 64
  %v585 = vpop.permute.xlu0 %584
  %v587 = vmul.f32 %v569, %v585
  %589 = vrot.lane.b32.xlu0 %v587, 32
  %v590 = vpop.permute.xlu0 %589
  %v591 = vsel %vm289, %v590, 0
  %593 = vmatprep.subr.mxu0 0.0
  %594 = vmatpush1.msra.mxu0 %v38
  %595 = vmatprep.subr.mxu0 0.0
  %596 = vmatpush1.msra.mxu0 %v39
  %597 = vmatprep.subr.mxu0 0.0
  %598 = vmatpush1.msra.mxu0 %v40
  %599 = vmatprep.subr.mxu0 0.0
  %600 = vmatpush1.msra.mxu0 %v41
  %601 = vmatprep.subr.mxu0 0.0
  %602 = vmatpush1.msra.mxu0 0.0
  %603 = vmatprep.subr.mxu0 0.0
  %604 = vmatpush1.msra.mxu0 0.0
  %605 = vmatprep.subr.mxu0 0.0
  %606 = vmatpush1.msra.mxu0 0.0
  %607 = vmatprep.subr.mxu0 0.0
  %608 = vmatpush1.msra.mxu0 0.0
  %609 = vmatprep.subr.mxu0 0.0
  %610 = vmatpush1.msra.mxu0 0.0
  %611 = vmatprep.subr.mxu0 0.0
  %612 = vmatpush1.msra.mxu0 0.0
  %613 = vmatprep.subr.mxu0 0.0
  %614 = vmatpush1.msra.mxu0 0.0
  %615 = vmatprep.subr.mxu0 0.0
  %616 = vmatpush1.msra.mxu0 0.0
  %617 = vmatprep.subr.mxu0 0.0
  %618 = vmatpush1.msra.mxu0 0.0
  %619 = vmatprep.subr.mxu0 0.0
  %620 = vmatpush1.msra.mxu0 0.0
  %621 = vmatprep.subr.mxu0 0.0
  %622 = vmatpush1.msra.mxu0 0.0
  %623 = vmatprep.subr.mxu0 0.0
  %624 = vmatpush1.msra.mxu0 0.0
  %625 = vmatprep.subr.mxu0 0.0
  %626 = vmatpush1.msra.mxu0 0.0
  %627 = vmatprep.subr.mxu0 0.0
  %628 = vmatpush1.msra.mxu0 0.0
  %629 = vmatprep.subr.mxu0 0.0
  %630 = vmatpush1.msra.mxu0 0.0
  %631 = vmatprep.subr.mxu0 0.0
  %632 = vmatpush1.msra.mxu0 0.0
  %633 = vmatprep.subr.mxu0 0.0
  %634 = vmatpush1.msra.mxu0 0.0
  %635 = vmatprep.subr.mxu0 0.0
  %636 = vmatpush1.msra.mxu0 0.0
  %637 = vmatprep.subr.mxu0 0.0
  %638 = vmatpush1.msra.mxu0 0.0
  %639 = vmatprep.subr.mxu0 0.0
  %640 = vmatpush1.msra.mxu0 0.0
  %641 = vmatprep.subr.mxu0 0.0
  %642 = vmatpush1.msra.mxu0 0.0
  %643 = vmatprep.subr.mxu0 0.0
  %644 = vmatpush1.msra.mxu0 0.0
  %645 = vmatprep.subr.mxu0 0.0
  %646 = vmatpush1.msra.mxu0 0.0
  %647 = vmatprep.subr.mxu0 0.0
  %648 = vmatpush1.msra.mxu0 0.0
  %649 = vmatprep.subr.mxu0 0.0
  %650 = vmatpush1.msra.mxu0 0.0
  %651 = vmatprep.subr.mxu0 0.0
  %652 = vmatpush1.msra.mxu0 0.0
  %653 = vmatprep.subr.mxu0 0.0
  %654 = vmatpush1.msra.mxu0 0.0
  %655 = vmatprep.subr.mxu0 0.0
  %656 = vmatpush1.msra.mxu0 0.0
  %657 = vmatprep.mubr.f32.mxu0 0.0
  %658 = vmatmul.mubr.f32.gmra.mrb[0].mxu0 %v591
  %v659 = vpop.f32.mrb[0].mxu0
  %v660 = vadd.f32 0.0, %v659
  %v661 = vpop.f32.mrb[0].mxu0
  %662 = vdwg.mxu0
  %v663 = vadd.f32 %v177, %v660
  %v664 = vxor.u32 %v663, 2147483648
  %v665 = vmul.f32 %v664, 1.442695
  %v666 = vpow.pop %v665
  %v667 = vadd.f32 %v666, 1.0
  %v668 = vrcp.pop %v667
  %v669 = vmul.f32 1.0, %v668
  %v670 = vtanh.pop %v663
  %v671 = vmul.f32 %v669, %v581
  %673 = vrot.lane.b32.xlu0 %v670, 64
  %v674 = vpop.permute.xlu0 %673
  %v676 = vmul.f32 %v669, %v674
  %678 = vrot.lane.b32.xlu0 %v676, 32
  %v679 = vpop.permute.xlu0 %678
  %v681 = vadd.f32 %v671, %v679
  %v682 = vtanh.pop %v681
  %684 = vrot.lane.b32.xlu0 %v682, 64
  %v685 = vpop.permute.xlu0 %684
  %v687 = vmul.f32 %v669, %v685
  %689 = vrot.lane.b32.xlu0 %v687, 32
  %v690 = vpop.permute.xlu0 %689
  %v691 = vsel %vm289, %v690, 0
  %693 = vmatprep.subr.mxu0 0.0
  %694 = vmatpush1.msra.mxu0 %v38
  %695 = vmatprep.subr.mxu0 0.0
  %696 = vmatpush1.msra.mxu0 %v39
  %697 = vmatprep.subr.mxu0 0.0
  %698 = vmatpush1.msra.mxu0 %v40
  %699 = vmatprep.subr.mxu0 0.0
  %700 = vmatpush1.msra.mxu0 %v41
  %701 = vmatprep.subr.mxu0 0.0
  %702 = vmatpush1.msra.mxu0 0.0
  %703 = vmatprep.subr.mxu0 0.0
  %704 = vmatpush1.msra.mxu0 0.0
  %705 = vmatprep.subr.mxu0 0.0
  %706 = vmatpush1.msra.mxu0 0.0
  %707 = vmatprep.subr.mxu0 0.0
  %708 = vmatpush1.msra.mxu0 0.0
  %709 = vmatprep.subr.mxu0 0.0
  %710 = vmatpush1.msra.mxu0 0.0
  %711 = vmatprep.subr.mxu0 0.0
  %712 = vmatpush1.msra.mxu0 0.0
  %713 = vmatprep.subr.mxu0 0.0
  %714 = vmatpush1.msra.mxu0 0.0
  %715 = vmatprep.subr.mxu0 0.0
  %716 = vmatpush1.msra.mxu0 0.0
  %717 = vmatprep.subr.mxu0 0.0
  %718 = vmatpush1.msra.mxu0 0.0
  %719 = vmatprep.subr.mxu0 0.0
  %720 = vmatpush1.msra.mxu0 0.0
  %721 = vmatprep.subr.mxu0 0.0
  %722 = vmatpush1.msra.mxu0 0.0
  %723 = vmatprep.subr.mxu0 0.0
  %724 = vmatpush1.msra.mxu0 0.0
  %725 = vmatprep.subr.mxu0 0.0
  %726 = vmatpush1.msra.mxu0 0.0
  %727 = vmatprep.subr.mxu0 0.0
  %728 = vmatpush1.msra.mxu0 0.0
  %729 = vmatprep.subr.mxu0 0.0
  %730 = vmatpush1.msra.mxu0 0.0
  %731 = vmatprep.subr.mxu0 0.0
  %732 = vmatpush1.msra.mxu0 0.0
  %733 = vmatprep.subr.mxu0 0.0
  %734 = vmatpush1.msra.mxu0 0.0
  %735 = vmatprep.subr.mxu0 0.0
  %736 = vmatpush1.msra.mxu0 0.0
  %737 = vmatprep.subr.mxu0 0.0
  %738 = vmatpush1.msra.mxu0 0.0
  %739 = vmatprep.subr.mxu0 0.0
  %740 = vmatpush1.msra.mxu0 0.0
  %741 = vmatprep.subr.mxu0 0.0
  %742 = vmatpush1.msra.mxu0 0.0
  %743 = vmatprep.subr.mxu0 0.0
  %744 = vmatpush1.msra.mxu0 0.0
  %745 = vmatprep.subr.mxu0 0.0
  %746 = vmatpush1.msra.mxu0 0.0
  %747 = vmatprep.subr.mxu0 0.0
  %748 = vmatpush1.msra.mxu0 0.0
  %749 = vmatprep.subr.mxu0 0.0
  %750 = vmatpush1.msra.mxu0 0.0
  %751 = vmatprep.subr.mxu0 0.0
  %752 = vmatpush1.msra.mxu0 0.0
  %753 = vmatprep.subr.mxu0 0.0
  %754 = vmatpush1.msra.mxu0 0.0
  %755 = vmatprep.subr.mxu0 0.0
  %756 = vmatpush1.msra.mxu0 0.0
  %757 = vmatprep.mubr.f32.mxu0 0.0
  %758 = vmatmul.mubr.f32.gmra.mrb[0].mxu0 %v691
  %v759 = vpop.f32.mrb[0].mxu0
  %v760 = vadd.f32 0.0, %v759
  %v761 = vpop.f32.mrb[0].mxu0
  %762 = vdwg.mxu0
  %v763 = vadd.f32 %v182, %v760
  %v764 = vxor.u32 %v763, 2147483648
  %v765 = vmul.f32 %v764, 1.442695
  %v766 = vpow.pop %v765
  %v767 = vadd.f32 %v766, 1.0
  %v768 = vrcp.pop %v767
  %v769 = vmul.f32 1.0, %v768
  %v770 = vtanh.pop %v763
  %v771 = vmul.f32 %v769, %v681
  %773 = vrot.lane.b32.xlu0 %v770, 64
  %v774 = vpop.permute.xlu0 %773
  %v776 = vmul.f32 %v769, %v774
  %778 = vrot.lane.b32.xlu0 %v776, 32
  %v779 = vpop.permute.xlu0 %778
  %v781 = vadd.f32 %v771, %v779
  %v782 = vtanh.pop %v781
  %784 = vrot.lane.b32.xlu0 %v782, 64
  %v785 = vpop.permute.xlu0 %784
  %v787 = vmul.f32 %v769, %v785
  %789 = vrot.lane.b32.xlu0 %v787, 32
  %v790 = vpop.permute.xlu0 %789
  %v791 = vsel %vm289, %v790, 0
  %793 = vmatprep.subr.mxu0 0.0
  %794 = vmatpush1.msra.mxu0 %v38
  %795 = vmatprep.subr.mxu0 0.0
  %796 = vmatpush1.msra.mxu0 %v39
  %797 = vmatprep.subr.mxu0 0.0
  %798 = vmatpush1.msra.mxu0 %v40
  %799 = vmatprep.subr.mxu0 0.0
  %800 = vmatpush1.msra.mxu0 %v41
  %801 = vmatprep.subr.mxu0 0.0
  %802 = vmatpush1.msra.mxu0 0.0
  %803 = vmatprep.subr.mxu0 0.0
  %804 = vmatpush1.msra.mxu0 0.0
  %805 = vmatprep.subr.mxu0 0.0
  %806 = vmatpush1.msra.mxu0 0.0
  %807 = vmatprep.subr.mxu0 0.0
  %808 = vmatpush1.msra.mxu0 0.0
  %809 = vmatprep.subr.mxu0 0.0
  %810 = vmatpush1.msra.mxu0 0.0
  %811 = vmatprep.subr.mxu0 0.0
  %812 = vmatpush1.msra.mxu0 0.0
  %813 = vmatprep.subr.mxu0 0.0
  %814 = vmatpush1.msra.mxu0 0.0
  %815 = vmatprep.subr.mxu0 0.0
  %816 = vmatpush1.msra.mxu0 0.0
  %817 = vmatprep.subr.mxu0 0.0
  %818 = vmatpush1.msra.mxu0 0.0
  %819 = vmatprep.subr.mxu0 0.0
  %820 = vmatpush1.msra.mxu0 0.0
  %821 = vmatprep.subr.mxu0 0.0
  %822 = vmatpush1.msra.mxu0 0.0
  %823 = vmatprep.subr.mxu0 0.0
  %824 = vmatpush1.msra.mxu0 0.0
  %825 = vmatprep.subr.mxu0 0.0
  %826 = vmatpush1.msra.mxu0 0.0
  %827 = vmatprep.subr.mxu0 0.0
  %828 = vmatpush1.msra.mxu0 0.0
  %829 = vmatprep.subr.mxu0 0.0
  %830 = vmatpush1.msra.mxu0 0.0
  %831 = vmatprep.subr.mxu0 0.0
  %832 = vmatpush1.msra.mxu0 0.0
  %833 = vmatprep.subr.mxu0 0.0
  %834 = vmatpush1.msra.mxu0 0.0
  %835 = vmatprep.subr.mxu0 0.0
  %836 = vmatpush1.msra.mxu0 0.0
  %837 = vmatprep.subr.mxu0 0.0
  %838 = vmatpush1.msra.mxu0 0.0
  %839 = vmatprep.subr.mxu0 0.0
  %840 = vmatpush1.msra.mxu0 0.0
  %841 = vmatprep.subr.mxu0 0.0
  %842 = vmatpush1.msra.mxu0 0.0
  %843 = vmatprep.subr.mxu0 0.0
  %844 = vmatpush1.msra.mxu0 0.0
  %845 = vmatprep.subr.mxu0 0.0
  %846 = vmatpush1.msra.mxu0 0.0
  %847 = vmatprep.subr.mxu0 0.0
  %848 = vmatpush1.msra.mxu0 0.0
  %849 = vmatprep.subr.mxu0 0.0
  %850 = vmatpush1.msra.mxu0 0.0
  %851 = vmatprep.subr.mxu0 0.0
  %852 = vmatpush1.msra.mxu0 0.0
  %853 = vmatprep.subr.mxu0 0.0
  %854 = vmatpush1.msra.mxu0 0.0
  %855 = vmatprep.subr.mxu0 0.0
  %856 = vmatpush1.msra.mxu0 0.0
  %857 = vmatprep.mubr.f32.mxu0 0.0
  %858 = vmatmul.mubr.f32.gmra.mrb[0].mxu0 %v791
  %v859 = vpop.f32.mrb[0].mxu0
  %v860 = vadd.f32 0.0, %v859
  %v861 = vpop.f32.mrb[0].mxu0
  %862 = vdwg.mxu0
  %v863 = vadd.f32 %v187, %v860
  %v864 = vxor.u32 %v863, 2147483648
  %v865 = vmul.f32 %v864, 1.442695
  %v866 = vpow.pop %v865
  %v867 = vadd.f32 %v866, 1.0
  %v868 = vrcp.pop %v867
  %v869 = vmul.f32 1.0, %v868
  %v870 = vtanh.pop %v863
  %v871 = vmul.f32 %v869, %v781
  %873 = vrot.lane.b32.xlu0 %v870, 64
  %v874 = vpop.permute.xlu0 %873
  %v876 = vmul.f32 %v869, %v874
  %878 = vrot.lane.b32.xlu0 %v876, 32
  %v879 = vpop.permute.xlu0 %878
  %v881 = vadd.f32 %v871, %v879
  %v882 = vtanh.pop %v881
  %884 = vrot.lane.b32.xlu0 %v882, 64
  %v885 = vpop.permute.xlu0 %884
  %v887 = vmul.f32 %v869, %v885
  %889 = vrot.lane.b32.xlu0 %v887, 32
  %v890 = vpop.permute.xlu0 %889
  %v891 = vsel %vm289, %v890, 0
  %893 = vmatprep.subr.mxu0 0.0
  %894 = vmatpush1.msra.mxu0 %v38
  %895 = vmatprep.subr.mxu0 0.0
  %896 = vmatpush1.msra.mxu0 %v39
  %897 = vmatprep.subr.mxu0 0.0
  %898 = vmatpush1.msra.mxu0 %v40
  %899 = vmatprep.subr.mxu0 0.0
  %900 = vmatpush1.msra.mxu0 %v41
  %901 = vmatprep.subr.mxu0 0.0
  %902 = vmatpush1.msra.mxu0 0.0
  %903 = vmatprep.subr.mxu0 0.0
  %904 = vmatpush1.msra.mxu0 0.0
  %905 = vmatprep.subr.mxu0 0.0
  %906 = vmatpush1.msra.mxu0 0.0
  %907 = vmatprep.subr.mxu0 0.0
  %908 = vmatpush1.msra.mxu0 0.0
  %909 = vmatprep.subr.mxu0 0.0
  %910 = vmatpush1.msra.mxu0 0.0
  %911 = vmatprep.subr.mxu0 0.0
  %912 = vmatpush1.msra.mxu0 0.0
  %913 = vmatprep.subr.mxu0 0.0
  %914 = vmatpush1.msra.mxu0 0.0
  %915 = vmatprep.subr.mxu0 0.0
  %916 = vmatpush1.msra.mxu0 0.0
  %917 = vmatprep.subr.mxu0 0.0
  %918 = vmatpush1.msra.mxu0 0.0
  %919 = vmatprep.subr.mxu0 0.0
  %920 = vmatpush1.msra.mxu0 0.0
  %921 = vmatprep.subr.mxu0 0.0
  %922 = vmatpush1.msra.mxu0 0.0
  %923 = vmatprep.subr.mxu0 0.0
  %924 = vmatpush1.msra.mxu0 0.0
  %925 = vmatprep.subr.mxu0 0.0
  %926 = vmatpush1.msra.mxu0 0.0
  %927 = vmatprep.subr.mxu0 0.0
  %928 = vmatpush1.msra.mxu0 0.0
  %929 = vmatprep.subr.mxu0 0.0
  %930 = vmatpush1.msra.mxu0 0.0
  %931 = vmatprep.subr.mxu0 0.0
  %932 = vmatpush1.msra.mxu0 0.0
  %933 = vmatprep.subr.mxu0 0.0
  %934 = vmatpush1.msra.mxu0 0.0
  %935 = vmatprep.subr.mxu0 0.0
  %936 = vmatpush1.msra.mxu0 0.0
  %937 = vmatprep.subr.mxu0 0.0
  %938 = vmatpush1.msra.mxu0 0.0
  %939 = vmatprep.subr.mxu0 0.0
  %940 = vmatpush1.msra.mxu0 0.0
  %941 = vmatprep.subr.mxu0 0.0
  %942 = vmatpush1.msra.mxu0 0.0
  %943 = vmatprep.subr.mxu0 0.0
  %944 = vmatpush1.msra.mxu0 0.0
  %945 = vmatprep.subr.mxu0 0.0
  %946 = vmatpush1.msra.mxu0 0.0
  %947 = vmatprep.subr.mxu0 0.0
  %948 = vmatpush1.msra.mxu0 0.0
  %949 = vmatprep.subr.mxu0 0.0
  %950 = vmatpush1.msra.mxu0 0.0
  %951 = vmatprep.subr.mxu0 0.0
  %952 = vmatpush1.msra.mxu0 0.0
  %953 = vmatprep.subr.mxu0 0.0
  %954 = vmatpush1.msra.mxu0 0.0
  %955 = vmatprep.subr.mxu0 0.0
  %956 = vmatpush1.msra.mxu0 0.0
  %957 = vmatprep.mubr.f32.mxu0 0.0
  %958 = vmatmul.mubr.f32.gmra.mrb[0].mxu0 %v891
  %v959 = vpop.f32.mrb[0].mxu0
  %v960 = vadd.f32 0.0, %v959
  %v961 = vpop.f32.mrb[0].mxu0
  %962 = vdwg.mxu0
  %v963 = vadd.f32 %v192, %v960
  %v964 = vxor.u32 %v963, 2147483648
  %v965 = vmul.f32 %v964, 1.442695
  %v966 = vpow.pop %v965
  %v967 = vadd.f32 %v966, 1.0
  %v968 = vrcp.pop %v967
  %v969 = vmul.f32 1.0, %v968
  %v970 = vtanh.pop %v963
  %v971 = vmul.f32 %v969, %v881
  %973 = vrot.lane.b32.xlu0 %v970, 64
  %v974 = vpop.permute.xlu0 %973
  %v976 = vmul.f32 %v969, %v974
  %978 = vrot.lane.b32.xlu0 %v976, 32
  %v979 = vpop.permute.xlu0 %978
  %v981 = vadd.f32 %v971, %v979
  %v982 = vtanh.pop %v981
  %984 = vrot.lane.b32.xlu0 %v982, 64
  %v985 = vpop.permute.xlu0 %984
  %v987 = vmul.f32 %v969, %v985
  %989 = vrot.lane.b32.xlu0 %v987, 32
  %v990 = vpop.permute.xlu0 %989
  %v991 = vsel %vm289, %v990, 0
  %993 = vmatprep.subr.mxu0 0.0
  %994 = vmatpush1.msra.mxu0 %v38
  %995 = vmatprep.subr.mxu0 0.0
  %996 = vmatpush1.msra.mxu0 %v39
  %997 = vmatprep.subr.mxu0 0.0
  %998 = vmatpush1.msra.mxu0 %v40
  %999 = vmatprep.subr.mxu0 0.0
  %1000 = vmatpush1.msra.mxu0 %v41
  %1001 = vmatprep.subr.mxu0 0.0
  %1002 = vmatpush1.msra.mxu0 0.0
  %1003 = vmatprep.subr.mxu0 0.0
  %1004 = vmatpush1.msra.mxu0 0.0
  %1005 = vmatprep.subr.mxu0 0.0
  %1006 = vmatpush1.msra.mxu0 0.0
  %1007 = vmatprep.subr.mxu0 0.0
  %1008 = vmatpush1.msra.mxu0 0.0
  %1009 = vmatprep.subr.mxu0 0.0
  %1010 = vmatpush1.msra.mxu0 0.0
  %1011 = vmatprep.subr.mxu0 0.0
  %1012 = vmatpush1.msra.mxu0 0.0
  %1013 = vmatprep.subr.mxu0 0.0
  %1014 = vmatpush1.msra.mxu0 0.0
  %1015 = vmatprep.subr.mxu0 0.0
  %1016 = vmatpush1.msra.mxu0 0.0
  %1017 = vmatprep.subr.mxu0 0.0
  %1018 = vmatpush1.msra.mxu0 0.0
  %1019 = vmatprep.subr.mxu0 0.0
  %1020 = vmatpush1.msra.mxu0 0.0
  %1021 = vmatprep.subr.mxu0 0.0
  %1022 = vmatpush1.msra.mxu0 0.0
  %1023 = vmatprep.subr.mxu0 0.0
  %1024 = vmatpush1.msra.mxu0 0.0
  %1025 = vmatprep.subr.mxu0 0.0
  %1026 = vmatpush1.msra.mxu0 0.0
  %1027 = vmatprep.subr.mxu0 0.0
  %1028 = vmatpush1.msra.mxu0 0.0
  %1029 = vmatprep.subr.mxu0 0.0
  %1030 = vmatpush1.msra.mxu0 0.0
  %1031 = vmatprep.subr.mxu0 0.0
  %1032 = vmatpush1.msra.mxu0 0.0
  %1033 = vmatprep.subr.mxu0 0.0
  %1034 = vmatpush1.msra.mxu0 0.0
  %1035 = vmatprep.subr.mxu0 0.0
  %1036 = vmatpush1.msra.mxu0 0.0
  %1037 = vmatprep.subr.mxu0 0.0
  %1038 = vmatpush1.msra.mxu0 0.0
  %1039 = vmatprep.subr.mxu0 0.0
  %1040 = vmatpush1.msra.mxu0 0.0
  %1041 = vmatprep.subr.mxu0 0.0
  %1042 = vmatpush1.msra.mxu0 0.0
  %1043 = vmatprep.subr.mxu0 0.0
  %1044 = vmatpush1.msra.mxu0 0.0
  %1045 = vmatprep.subr.mxu0 0.0
  %1046 = vmatpush1.msra.mxu0 0.0
  %1047 = vmatprep.subr.mxu0 0.0
  %1048 = vmatpush1.msra.mxu0 0.0
  %1049 = vmatprep.subr.mxu0 0.0
  %1050 = vmatpush1.msra.mxu0 0.0
  %1051 = vmatprep.subr.mxu0 0.0
  %1052 = vmatpush1.msra.mxu0 0.0
  %1053 = vmatprep.subr.mxu0 0.0
  %1054 = vmatpush1.msra.mxu0 0.0
  %1055 = vmatprep.subr.mxu0 0.0
  %1056 = vmatpush1.msra.mxu0 0.0
  %1057 = vmatprep.mubr.f32.mxu0 0.0
  %1058 = vmatmul.mubr.f32.gmra.mrb[0].mxu0 %v991
  %v1059 = vpop.f32.mrb[0].mxu0
  %v1060 = vadd.f32 0.0, %v1059
  %v1061 = vpop.f32.mrb[0].mxu0
  %1062 = vdwg.mxu0
  %v1063 = vadd.f32 %v197, %v1060
  %v1064 = vxor.u32 %v1063, 2147483648
  %v1065 = vmul.f32 %v1064, 1.442695
  %v1066 = vpow.pop %v1065
  %v1067 = vadd.f32 %v1066, 1.0
  %v1068 = vrcp.pop %v1067
  %v1069 = vmul.f32 1.0, %v1068
  %v1070 = vtanh.pop %v1063
  %v1071 = vmul.f32 %v1069, %v981
  %1073 = vrot.lane.b32.xlu0 %v1070, 64
  %v1074 = vpop.permute.xlu0 %1073
  %v1076 = vmul.f32 %v1069, %v1074
  %1078 = vrot.lane.b32.xlu0 %v1076, 32
  %v1079 = vpop.permute.xlu0 %1078
  %v1081 = vadd.f32 %v1071, %v1079
  %v1082 = vtanh.pop %v1081
  %1084 = vrot.lane.b32.xlu0 %v1082, 64
  %v1085 = vpop.permute.xlu0 %1084
  %v1087 = vmul.f32 %v1069, %v1085
  %1089 = vrot.lane.b32.xlu0 %v1087, 32
  %v1090 = vpop.permute.xlu0 %1089
  %v1091 = vsel %vm289, %v1090, 0
  %1093 = vmatprep.subr.mxu0 0.0
  %1094 = vmatpush1.msra.mxu0 %v42
  %1095 = vmatprep.subr.mxu0 0.0
  %1096 = vmatpush1.msra.mxu0 %v43
  %1097 = vmatprep.subr.mxu0 0.0
  %1098 = vmatpush1.msra.mxu0 %v44
  %1099 = vmatprep.subr.mxu0 0.0
  %1100 = vmatpush1.msra.mxu0 %v45
  %1101 = vmatprep.subr.mxu0 0.0
  %1102 = vmatpush1.msra.mxu0 0.0
  %1103 = vmatprep.subr.mxu0 0.0
  %1104 = vmatpush1.msra.mxu0 0.0
  %1105 = vmatprep.subr.mxu0 0.0
  %1106 = vmatpush1.msra.mxu0 0.0
  %1107 = vmatprep.subr.mxu0 0.0
  %1108 = vmatpush1.msra.mxu0 0.0
  %1109 = vmatprep.subr.mxu0 0.0
  %1110 = vmatpush1.msra.mxu0 0.0
  %1111 = vmatprep.subr.mxu0 0.0
  %1112 = vmatpush1.msra.mxu0 0.0
  %1113 = vmatprep.subr.mxu0 0.0
  %1114 = vmatpush1.msra.mxu0 0.0
  %1115 = vmatprep.subr.mxu0 0.0
  %1116 = vmatpush1.msra.mxu0 0.0
  %1117 = vmatprep.subr.mxu0 0.0
  %1118 = vmatpush1.msra.mxu0 0.0
  %1119 = vmatprep.subr.mxu0 0.0
  %1120 = vmatpush1.msra.mxu0 0.0
  %1121 = vmatprep.subr.mxu0 0.0
  %1122 = vmatpush1.msra.mxu0 0.0
  %1123 = vmatprep.subr.mxu0 0.0
  %1124 = vmatpush1.msra.mxu0 0.0
  %1125 = vmatprep.subr.mxu0 0.0
  %1126 = vmatpush1.msra.mxu0 0.0
  %1127 = vmatprep.subr.mxu0 0.0
  %1128 = vmatpush1.msra.mxu0 0.0
  %1129 = vmatprep.subr.mxu0 0.0
  %1130 = vmatpush1.msra.mxu0 0.0
  %1131 = vmatprep.subr.mxu0 0.0
  %1132 = vmatpush1.msra.mxu0 0.0
  %1133 = vmatprep.subr.mxu0 0.0
  %1134 = vmatpush1.msra.mxu0 0.0
  %1135 = vmatprep.subr.mxu0 0.0
  %1136 = vmatpush1.msra.mxu0 0.0
  %1137 = vmatprep.subr.mxu0 0.0
  %1138 = vmatpush1.msra.mxu0 0.0
  %1139 = vmatprep.subr.mxu0 0.0
  %1140 = vmatpush1.msra.mxu0 0.0
  %1141 = vmatprep.subr.mxu0 0.0
  %1142 = vmatpush1.msra.mxu0 0.0
  %1143 = vmatprep.subr.mxu0 0.0
  %1144 = vmatpush1.msra.mxu0 0.0
  %1145 = vmatprep.subr.mxu0 0.0
  %1146 = vmatpush1.msra.mxu0 0.0
  %1147 = vmatprep.subr.mxu0 0.0
  %1148 = vmatpush1.msra.mxu0 0.0
  %1149 = vmatprep.subr.mxu0 0.0
  %1150 = vmatpush1.msra.mxu0 0.0
  %1151 = vmatprep.subr.mxu0 0.0
  %1152 = vmatpush1.msra.mxu0 0.0
  %1153 = vmatprep.subr.mxu0 0.0
  %1154 = vmatpush1.msra.mxu0 0.0
  %1155 = vmatprep.subr.mxu0 0.0
  %1156 = vmatpush1.msra.mxu0 0.0
  %1157 = vmatprep.mubr.f32.mxu0 0.0
  %1158 = vmatmul.mubr.f32.gmra.mrb[0].mxu0 %v1091
  %v1159 = vpop.f32.mrb[0].mxu0
  %v1160 = vadd.f32 0.0, %v1159
  %v1161 = vpop.f32.mrb[0].mxu0
  %1162 = vdwg.mxu0
  %v1163 = vadd.f32 %v279, %v1160
  %v1164 = vxor.u32 %v1163, 2147483648
  %v1165 = vmul.f32 %v1164, 1.442695
  %v1166 = vpow.pop %v1165
  %v1167 = vadd.f32 %v1166, 1.0
  %v1168 = vrcp.pop %v1167
  %v1169 = vmul.f32 1.0, %v1168
  %v1170 = vtanh.pop %v1163
  %v1171 = vmul.f32 %v1169, %v1081
  %1173 = vrot.lane.b32.xlu0 %v1170, 64
  %v1174 = vpop.permute.xlu0 %1173
  %v1176 = vmul.f32 %v1169, %v1174
  %1178 = vrot.lane.b32.xlu0 %v1176, 32
  %v1179 = vpop.permute.xlu0 %1178
  %v1181 = vadd.f32 %v1171, %v1179
  %v1182 = vtanh.pop %v1181
  %1184 = vrot.lane.b32.xlu0 %v1182, 64
  %v1185 = vpop.permute.xlu0 %1184
  %v1187 = vmul.f32 %v1169, %v1185
  %1189 = vrot.lane.b32.xlu0 %v1187, 32
  %v1190 = vpop.permute.xlu0 %1189
  %v1191 = vsel %vm289, %v1190, 0
  %1193 = vmatprep.subr.mxu0 0.0
  %1194 = vmatpush1.msra.mxu0 %v46
  %1195 = vmatprep.subr.mxu0 0.0
  %1196 = vmatpush1.msra.mxu0 %v47
  %1197 = vmatprep.subr.mxu0 0.0
  %1198 = vmatpush1.msra.mxu0 %v48
  %1199 = vmatprep.subr.mxu0 0.0
  %1200 = vmatpush1.msra.mxu0 %v49
  %1201 = vmatprep.subr.mxu0 0.0
  %1202 = vmatpush1.msra.mxu0 0.0
  %1203 = vmatprep.subr.mxu0 0.0
  %1204 = vmatpush1.msra.mxu0 0.0
  %1205 = vmatprep.subr.mxu0 0.0
  %1206 = vmatpush1.msra.mxu0 0.0
  %1207 = vmatprep.subr.mxu0 0.0
  %1208 = vmatpush1.msra.mxu0 0.0
  %1209 = vmatprep.subr.mxu0 0.0
  %1210 = vmatpush1.msra.mxu0 0.0
  %1211 = vmatprep.subr.mxu0 0.0
  %1212 = vmatpush1.msra.mxu0 0.0
  %1213 = vmatprep.subr.mxu0 0.0
  %1214 = vmatpush1.msra.mxu0 0.0
  %1215 = vmatprep.subr.mxu0 0.0
  %1216 = vmatpush1.msra.mxu0 0.0
  %1217 = vmatprep.subr.mxu0 0.0
  %1218 = vmatpush1.msra.mxu0 0.0
  %1219 = vmatprep.subr.mxu0 0.0
  %1220 = vmatpush1.msra.mxu0 0.0
  %1221 = vmatprep.subr.mxu0 0.0
  %1222 = vmatpush1.msra.mxu0 0.0
  %1223 = vmatprep.subr.mxu0 0.0
  %1224 = vmatpush1.msra.mxu0 0.0
  %1225 = vmatprep.subr.mxu0 0.0
  %1226 = vmatpush1.msra.mxu0 0.0
  %1227 = vmatprep.subr.mxu0 0.0
  %1228 = vmatpush1.msra.mxu0 0.0
  %1229 = vmatprep.subr.mxu0 0.0
  %1230 = vmatpush1.msra.mxu0 0.0
  %1231 = vmatprep.subr.mxu0 0.0
  %1232 = vmatpush1.msra.mxu0 0.0
  %1233 = vmatprep.subr.mxu0 0.0
  %1234 = vmatpush1.msra.mxu0 0.0
  %1235 = vmatprep.subr.mxu0 0.0
  %1236 = vmatpush1.msra.mxu0 0.0
  %1237 = vmatprep.subr.mxu0 0.0
  %1238 = vmatpush1.msra.mxu0 0.0
  %1239 = vmatprep.subr.mxu0 0.0
  %1240 = vmatpush1.msra.mxu0 0.0
  %1241 = vmatprep.subr.mxu0 0.0
  %1242 = vmatpush1.msra.mxu0 0.0
  %1243 = vmatprep.subr.mxu0 0.0
  %1244 = vmatpush1.msra.mxu0 0.0
  %1245 = vmatprep.subr.mxu0 0.0
  %1246 = vmatpush1.msra.mxu0 0.0
  %1247 = vmatprep.subr.mxu0 0.0
  %1248 = vmatpush1.msra.mxu0 0.0
  %1249 = vmatprep.subr.mxu0 0.0
  %1250 = vmatpush1.msra.mxu0 0.0
  %1251 = vmatprep.subr.mxu0 0.0
  %1252 = vmatpush1.msra.mxu0 0.0
  %1253 = vmatprep.subr.mxu0 0.0
  %1254 = vmatpush1.msra.mxu0 0.0
  %1255 = vmatprep.subr.mxu0 0.0
  %1256 = vmatpush1.msra.mxu0 0.0
  %1257 = vmatprep.mubr.f32.mxu0 0.0
  %1258 = vmatmul.mubr.f32.gmra.mrb[0].mxu0 %v1191
  %v1259 = vpop.f32.mrb[0].mxu0
  %v1260 = vadd.f32 %v287, %v1259
  %v1261 = vpop.f32.mrb[0].mxu0
  %1262 = vdwg.mxu0
  %v1263 = vxor.u32 %v1260, 2147483648
  %v1264 = vmul.f32 %v1263, 1.442695
  %v1265 = vpow.pop %v1264
  %v1266 = vadd.f32 %v1265, 1.0
  %v1267 = vrcp.pop %v1266
  %v1268 = vmul.f32 1.0, %v1267
  %v1269 = vtanh.pop %v1260
  %v1270 = vmul.f32 %v1268, %v1181
  %1272 = vrot.lane.b32.xlu0 %v1269, 64
  %v1273 = vpop.permute.xlu0 %1272
  %v1275 = vmul.f32 %v1268, %v1273
  %1277 = vrot.lane.b32.xlu0 %v1275, 32
  %v1278 = vpop.permute.xlu0 %1277
  %v1280 = vadd.f32 %v1270, %v1278
  %v1281 = vtanh.pop %v1280
  %1283 = vrot.lane.b32.xlu0 %v1281, 64
  %v1284 = vpop.permute.xlu0 %1283
  %v1286 = vmul.f32 %v1268, %v1284
  %1288 = vrot.lane.b32.xlu0 %v1286, 32
  %v1289 = vpop.permute.xlu0 %1288
  %v1290 = vsel %vm289, %v1289, 0
  %1292 = vmatprep.subr.mxu0 0.0
  %1293 = vmatpush1.msra.mxu0 %v46
  %1294 = vmatprep.subr.mxu0 0.0
  %1295 = vmatpush1.msra.mxu0 %v47
  %1296 = vmatprep.subr.mxu0 0.0
  %1297 = vmatpush1.msra.mxu0 %v48
  %1298 = vmatprep.subr.mxu0 0.0
  %1299 = vmatpush1.msra.mxu0 %v49
  %1300 = vmatprep.subr.mxu0 0.0
  %1301 = vmatpush1.msra.mxu0 0.0
  %1302 = vmatprep.subr.mxu0 0.0
  %1303 = vmatpush1.msra.mxu0 0.0
  %1304 = vmatprep.subr.mxu0 0.0
  %1305 = vmatpush1.msra.mxu0 0.0
  %1306 = vmatprep.subr.mxu0 0.0
  %1307 = vmatpush1.msra.mxu0 0.0
  %1308 = vmatprep.subr.mxu0 0.0
  %1309 = vmatpush1.msra.mxu0 0.0
  %1310 = vmatprep.subr.mxu0 0.0
  %1311 = vmatpush1.msra.mxu0 0.0
  %1312 = vmatprep.subr.mxu0 0.0
  %1313 = vmatpush1.msra.mxu0 0.0
  %1314 = vmatprep.subr.mxu0 0.0
  %1315 = vmatpush1.msra.mxu0 0.0
  %1316 = vmatprep.subr.mxu0 0.0
  %1317 = vmatpush1.msra.mxu0 0.0
  %1318 = vmatprep.subr.mxu0 0.0
  %1319 = vmatpush1.msra.mxu0 0.0
  %1320 = vmatprep.subr.mxu0 0.0
  %1321 = vmatpush1.msra.mxu0 0.0
  %1322 = vmatprep.subr.mxu0 0.0
  %1323 = vmatpush1.msra.mxu0 0.0
  %1324 = vmatprep.subr.mxu0 0.0
  %1325 = vmatpush1.msra.mxu0 0.0
  %1326 = vmatprep.subr.mxu0 0.0
  %1327 = vmatpush1.msra.mxu0 0.0
  %1328 = vmatprep.subr.mxu0 0.0
  %1329 = vmatpush1.msra.mxu0 0.0
  %1330 = vmatprep.subr.mxu0 0.0
  %1331 = vmatpush1.msra.mxu0 0.0
  %1332 = vmatprep.subr.mxu0 0.0
  %1333 = vmatpush1.msra.mxu0 0.0
  %1334 = vmatprep.subr.mxu0 0.0
  %1335 = vmatpush1.msra.mxu0 0.0
  %1336 = vmatprep.subr.mxu0 0.0
  %1337 = vmatpush1.msra.mxu0 0.0
  %1338 = vmatprep.subr.mxu0 0.0
  %1339 = vmatpush1.msra.mxu0 0.0
  %1340 = vmatprep.subr.mxu0 0.0
  %1341 = vmatpush1.msra.mxu0 0.0
  %1342 = vmatprep.subr.mxu0 0.0
  %1343 = vmatpush1.msra.mxu0 0.0
  %1344 = vmatprep.subr.mxu0 0.0
  %1345 = vmatpush1.msra.mxu0 0.0
  %1346 = vmatprep.subr.mxu0 0.0
  %1347 = vmatpush1.msra.mxu0 0.0
  %1348 = vmatprep.subr.mxu0 0.0
  %1349 = vmatpush1.msra.mxu0 0.0
  %1350 = vmatprep.subr.mxu0 0.0
  %1351 = vmatpush1.msra.mxu0 0.0
  %1352 = vmatprep.subr.mxu0 0.0
  %1353 = vmatpush1.msra.mxu0 0.0
  %1354 = vmatprep.subr.mxu0 0.0
  %1355 = vmatpush1.msra.mxu0 0.0
  %1356 = vmatprep.mubr.f32.mxu0 0.0
  %1357 = vmatmul.mubr.f32.gmra.mrb[0].mxu0 %v1290
  %v1358 = vpop.f32.mrb[0].mxu0
  %v1359 = vadd.f32 %v287, %v1358
  %v1360 = vpop.f32.mrb[0].mxu0
  %1361 = vdwg.mxu0
  %v1362 = vxor.u32 %v1359, 2147483648
  %v1363 = vmul.f32 %v1362, 1.442695
  %v1364 = vpow.pop %v1363
  %v1365 = vadd.f32 %v1364, 1.0
  %v1366 = vrcp.pop %v1365
  %v1367 = vmul.f32 1.0, %v1366
  %v1368 = vtanh.pop %v1359
  %v1369 = vmul.f32 %v1367, %v1280
  %1371 = vrot.lane.b32.xlu0 %v1368, 64
  %v1372 = vpop.permute.xlu0 %1371
  %v1374 = vmul.f32 %v1367, %v1372
  %1376 = vrot.lane.b32.xlu0 %v1374, 32
  %v1377 = vpop.permute.xlu0 %1376
  %v1379 = vadd.f32 %v1369, %v1377
  %v1380 = vtanh.pop %v1379
  %1382 = vrot.lane.b32.xlu0 %v1380, 64
  %v1383 = vpop.permute.xlu0 %1382
  %v1385 = vmul.f32 %v1367, %v1383
  %1387 = vrot.lane.b32.xlu0 %v1385, 32
  %v1388 = vpop.permute.xlu0 %1387
  %v1389 = vsel %vm289, %v1388, 0
  %1391 = vmatprep.subr.mxu0 0.0
  %1392 = vmatpush1.msra.mxu0 %v46
  %1393 = vmatprep.subr.mxu0 0.0
  %1394 = vmatpush1.msra.mxu0 %v47
  %1395 = vmatprep.subr.mxu0 0.0
  %1396 = vmatpush1.msra.mxu0 %v48
  %1397 = vmatprep.subr.mxu0 0.0
  %1398 = vmatpush1.msra.mxu0 %v49
  %1399 = vmatprep.subr.mxu0 0.0
  %1400 = vmatpush1.msra.mxu0 0.0
  %1401 = vmatprep.subr.mxu0 0.0
  %1402 = vmatpush1.msra.mxu0 0.0
  %1403 = vmatprep.subr.mxu0 0.0
  %1404 = vmatpush1.msra.mxu0 0.0
  %1405 = vmatprep.subr.mxu0 0.0
  %1406 = vmatpush1.msra.mxu0 0.0
  %1407 = vmatprep.subr.mxu0 0.0
  %1408 = vmatpush1.msra.mxu0 0.0
  %1409 = vmatprep.subr.mxu0 0.0
  %1410 = vmatpush1.msra.mxu0 0.0
  %1411 = vmatprep.subr.mxu0 0.0
  %1412 = vmatpush1.msra.mxu0 0.0
  %1413 = vmatprep.subr.mxu0 0.0
  %1414 = vmatpush1.msra.mxu0 0.0
  %1415 = vmatprep.subr.mxu0 0.0
  %1416 = vmatpush1.msra.mxu0 0.0
  %1417 = vmatprep.subr.mxu0 0.0
  %1418 = vmatpush1.msra.mxu0 0.0
  %1419 = vmatprep.subr.mxu0 0.0
  %1420 = vmatpush1.msra.mxu0 0.0
  %1421 = vmatprep.subr.mxu0 0.0
  %1422 = vmatpush1.msra.mxu0 0.0
  %1423 = vmatprep.subr.mxu0 0.0
  %1424 = vmatpush1.msra.mxu0 0.0
  %1425 = vmatprep.subr.mxu0 0.0
  %1426 = vmatpush1.msra.mxu0 0.0
  %1427 = vmatprep.subr.mxu0 0.0
  %1428 = vmatpush1.msra.mxu0 0.0
  %1429 = vmatprep.subr.mxu0 0.0
  %1430 = vmatpush1.msra.mxu0 0.0
  %1431 = vmatprep.subr.mxu0 0.0
  %1432 = vmatpush1.msra.mxu0 0.0
  %1433 = vmatprep.subr.mxu0 0.0
  %1434 = vmatpush1.msra.mxu0 0.0
  %1435 = vmatprep.subr.mxu0 0.0
  %1436 = vmatpush1.msra.mxu0 0.0
  %1437 = vmatprep.subr.mxu0 0.0
  %1438 = vmatpush1.msra.mxu0 0.0
  %1439 = vmatprep.subr.mxu0 0.0
  %1440 = vmatpush1.msra.mxu0 0.0
  %1441 = vmatprep.subr.mxu0 0.0
  %1442 = vmatpush1.msra.mxu0 0.0
  %1443 = vmatprep.subr.mxu0 0.0
  %1444 = vmatpush1.msra.mxu0 0.0
  %1445 = vmatprep.subr.mxu0 0.0
  %1446 = vmatpush1.msra.mxu0 0.0
  %1447 = vmatprep.subr.mxu0 0.0
  %1448 = vmatpush1.msra.mxu0 0.0
  %1449 = vmatprep.subr.mxu0 0.0
  %1450 = vmatpush1.msra.mxu0 0.0
  %1451 = vmatprep.subr.mxu0 0.0
  %1452 = vmatpush1.msra.mxu0 0.0
  %1453 = vmatprep.subr.mxu0 0.0
  %1454 = vmatpush1.msra.mxu0 0.0
  %1455 = vmatprep.mubr.f32.mxu0 0.0
  %1456 = vmatmul.mubr.f32.gmra.mrb[0].mxu0 %v1389
  %v1457 = vpop.f32.mrb[0].mxu0
  %v1458 = vadd.f32 %v287, %v1457
  %v1459 = vpop.f32.mrb[0].mxu0
  %1460 = vdwg.mxu0
  %v1461 = vxor.u32 %v1458, 2147483648
  %v1462 = vmul.f32 %v1461, 1.442695
  %v1463 = vpow.pop %v1462
  %v1464 = vadd.f32 %v1463, 1.0
  %v1465 = vrcp.pop %v1464
  %v1466 = vmul.f32 1.0, %v1465
  %v1467 = vtanh.pop %v1458
  %v1468 = vmul.f32 %v1466, %v1379
  %1470 = vrot.lane.b32.xlu0 %v1467, 64
  %v1471 = vpop.permute.xlu0 %1470
  %v1473 = vmul.f32 %v1466, %v1471
  %1475 = vrot.lane.b32.xlu0 %v1473, 32
  %v1476 = vpop.permute.xlu0 %1475
  %v1478 = vadd.f32 %v1468, %v1476
  %v1479 = vtanh.pop %v1478
  %1481 = vrot.lane.b32.xlu0 %v1479, 64
  %v1482 = vpop.permute.xlu0 %1481
  %v1484 = vmul.f32 %v1466, %v1482
  %1486 = vrot.lane.b32.xlu0 %v1484, 32
  %v1487 = vpop.permute.xlu0 %1486
  %v1488 = vsel %vm289, %v1487, 0
  %1490 = vmatprep.subr.mxu0 0.0
  %1491 = vmatpush1.msra.mxu0 %v46
  %1492 = vmatprep.subr.mxu0 0.0
  %1493 = vmatpush1.msra.mxu0 %v47
  %1494 = vmatprep.subr.mxu0 0.0
  %1495 = vmatpush1.msra.mxu0 %v48
  %1496 = vmatprep.subr.mxu0 0.0
  %1497 = vmatpush1.msra.mxu0 %v49
  %1498 = vmatprep.subr.mxu0 0.0
  %1499 = vmatpush1.msra.mxu0 0.0
  %1500 = vmatprep.subr.mxu0 0.0
  %1501 = vmatpush1.msra.mxu0 0.0
  %1502 = vmatprep.subr.mxu0 0.0
  %1503 = vmatpush1.msra.mxu0 0.0
  %1504 = vmatprep.subr.mxu0 0.0
  %1505 = vmatpush1.msra.mxu0 0.0
  %1506 = vmatprep.subr.mxu0 0.0
  %1507 = vmatpush1.msra.mxu0 0.0
  %1508 = vmatprep.subr.mxu0 0.0
  %1509 = vmatpush1.msra.mxu0 0.0
  %1510 = vmatprep.subr.mxu0 0.0
  %1511 = vmatpush1.msra.mxu0 0.0
  %1512 = vmatprep.subr.mxu0 0.0
  %1513 = vmatpush1.msra.mxu0 0.0
  %1514 = vmatprep.subr.mxu0 0.0
  %1515 = vmatpush1.msra.mxu0 0.0
  %1516 = vmatprep.subr.mxu0 0.0
  %1517 = vmatpush1.msra.mxu0 0.0
  %1518 = vmatprep.subr.mxu0 0.0
  %1519 = vmatpush1.msra.mxu0 0.0
  %1520 = vmatprep.subr.mxu0 0.0
  %1521 = vmatpush1.msra.mxu0 0.0
  %1522 = vmatprep.subr.mxu0 0.0
  %1523 = vmatpush1.msra.mxu0 0.0
  %1524 = vmatprep.subr.mxu0 0.0
  %1525 = vmatpush1.msra.mxu0 0.0
  %1526 = vmatprep.subr.mxu0 0.0
  %1527 = vmatpush1.msra.mxu0 0.0
  %1528 = vmatprep.subr.mxu0 0.0
  %1529 = vmatpush1.msra.mxu0 0.0
  %1530 = vmatprep.subr.mxu0 0.0
  %1531 = vmatpush1.msra.mxu0 0.0
  %1532 = vmatprep.subr.mxu0 0.0
  %1533 = vmatpush1.msra.mxu0 0.0
  %1534 = vmatprep.subr.mxu0 0.0
  %1535 = vmatpush1.msra.mxu0 0.0
  %1536 = vmatprep.subr.mxu0 0.0
  %1537 = vmatpush1.msra.mxu0 0.0
  %1538 = vmatprep.subr.mxu0 0.0
  %1539 = vmatpush1.msra.mxu0 0.0
  %1540 = vmatprep.subr.mxu0 0.0
  %1541 = vmatpush1.msra.mxu0 0.0
  %1542 = vmatprep.subr.mxu0 0.0
  %1543 = vmatpush1.msra.mxu0 0.0
  %1544 = vmatprep.subr.mxu0 0.0
  %1545 = vmatpush1.msra.mxu0 0.0
  %1546 = vmatprep.subr.mxu0 0.0
  %1547 = vmatpush1.msra.mxu0 0.0
  %1548 = vmatprep.subr.mxu0 0.0
  %1549 = vmatpush1.msra.mxu0 0.0
  %1550 = vmatprep.subr.mxu0 0.0
  %1551 = vmatpush1.msra.mxu0 0.0
  %1552 = vmatprep.subr.mxu0 0.0
  %1553 = vmatpush1.msra.mxu0 0.0
  %1554 = vmatprep.mubr.f32.mxu0 0.0
  %1555 = vmatmul.mubr.f32.gmra.mrb[0].mxu0 %v1488
  %v1556 = vpop.f32.mrb[0].mxu0
  %v1557 = vadd.f32 %v287, %v1556
  %v1558 = vpop.f32.mrb[0].mxu0
  %1559 = vdwg.mxu0
  %v1560 = vxor.u32 %v1557, 2147483648
  %v1561 = vmul.f32 %v1560, 1.442695
  %v1562 = vpow.pop %v1561
  %v1563 = vadd.f32 %v1562, 1.0
  %v1564 = vrcp.pop %v1563
  %v1565 = vmul.f32 1.0, %v1564
  %v1566 = vtanh.pop %v1557
  %v1567 = vmul.f32 %v1565, %v1478
  %1569 = vrot.lane.b32.xlu0 %v1566, 64
  %v1570 = vpop.permute.xlu0 %1569
  %v1572 = vmul.f32 %v1565, %v1570
  %1574 = vrot.lane.b32.xlu0 %v1572, 32
  %v1575 = vpop.permute.xlu0 %1574
  %v1577 = vadd.f32 %v1567, %v1575
  %v1578 = vtanh.pop %v1577
  %1580 = vrot.lane.b32.xlu0 %v1578, 64
  %v1581 = vpop.permute.xlu0 %1580
  %v1583 = vmul.f32 %v1565, %v1581
  %1585 = vrot.lane.b32.xlu0 %v1583, 32
  %v1586 = vpop.permute.xlu0 %1585
  %v1587 = vsel %vm289, %v1586, 0
  %1589 = vmatprep.subr.mxu0 0.0
  %1590 = vmatpush1.msra.mxu0 %v46
  %1591 = vmatprep.subr.mxu0 0.0
  %1592 = vmatpush1.msra.mxu0 %v47
  %1593 = vmatprep.subr.mxu0 0.0
  %1594 = vmatpush1.msra.mxu0 %v48
  %1595 = vmatprep.subr.mxu0 0.0
  %1596 = vmatpush1.msra.mxu0 %v49
  %1597 = vmatprep.subr.mxu0 0.0
  %1598 = vmatpush1.msra.mxu0 0.0
  %1599 = vmatprep.subr.mxu0 0.0
  %1600 = vmatpush1.msra.mxu0 0.0
  %1601 = vmatprep.subr.mxu0 0.0
  %1602 = vmatpush1.msra.mxu0 0.0
  %1603 = vmatprep.subr.mxu0 0.0
  %1604 = vmatpush1.msra.mxu0 0.0
  %1605 = vmatprep.subr.mxu0 0.0
  %1606 = vmatpush1.msra.mxu0 0.0
  %1607 = vmatprep.subr.mxu0 0.0
  %1608 = vmatpush1.msra.mxu0 0.0
  %1609 = vmatprep.subr.mxu0 0.0
  %1610 = vmatpush1.msra.mxu0 0.0
  %1611 = vmatprep.subr.mxu0 0.0
  %1612 = vmatpush1.msra.mxu0 0.0
  %1613 = vmatprep.subr.mxu0 0.0
  %1614 = vmatpush1.msra.mxu0 0.0
  %1615 = vmatprep.subr.mxu0 0.0
  %1616 = vmatpush1.msra.mxu0 0.0
  %1617 = vmatprep.subr.mxu0 0.0
  %1618 = vmatpush1.msra.mxu0 0.0
  %1619 = vmatprep.subr.mxu0 0.0
  %1620 = vmatpush1.msra.mxu0 0.0
  %1621 = vmatprep.subr.mxu0 0.0
  %1622 = vmatpush1.msra.mxu0 0.0
  %1623 = vmatprep.subr.mxu0 0.0
  %1624 = vmatpush1.msra.mxu0 0.0
  %1625 = vmatprep.subr.mxu0 0.0
  %1626 = vmatpush1.msra.mxu0 0.0
  %1627 = vmatprep.subr.mxu0 0.0
  %1628 = vmatpush1.msra.mxu0 0.0
  %1629 = vmatprep.subr.mxu0 0.0
  %1630 = vmatpush1.msra.mxu0 0.0
  %1631 = vmatprep.subr.mxu0 0.0
  %1632 = vmatpush1.msra.mxu0 0.0
  %1633 = vmatprep.subr.mxu0 0.0
  %1634 = vmatpush1.msra.mxu0 0.0
  %1635 = vmatprep.subr.mxu0 0.0
  %1636 = vmatpush1.msra.mxu0 0.0
  %1637 = vmatprep.subr.mxu0 0.0
  %1638 = vmatpush1.msra.mxu0 0.0
  %1639 = vmatprep.subr.mxu0 0.0
  %1640 = vmatpush1.msra.mxu0 0.0
  %1641 = vmatprep.subr.mxu0 0.0
  %1642 = vmatpush1.msra.mxu0 0.0
  %1643 = vmatprep.subr.mxu0 0.0
  %1644 = vmatpush1.msra.mxu0 0.0
  %1645 = vmatprep.subr.mxu0 0.0
  %1646 = vmatpush1.msra.mxu0 0.0
  %1647 = vmatprep.subr.mxu0 0.0
  %1648 = vmatpush1.msra.mxu0 0.0
  %1649 = vmatprep.subr.mxu0 0.0
  %1650 = vmatpush1.msra.mxu0 0.0
  %1651 = vmatprep.subr.mxu0 0.0
  %1652 = vmatpush1.msra.mxu0 0.0
  %1653 = vmatprep.mubr.f32.mxu0 0.0
  %1654 = vmatmul.mubr.f32.gmra.mrb[0].mxu0 %v1587
  %v1655 = vpop.f32.mrb[0].mxu0
  %v1656 = vadd.f32 %v287, %v1655
  %v1657 = vpop.f32.mrb[0].mxu0
  %1658 = vdwg.mxu0
  %v1659 = vxor.u32 %v1656, 2147483648
  %v1660 = vmul.f32 %v1659, 1.442695
  %v1661 = vpow.pop %v1660
  %v1662 = vadd.f32 %v1661, 1.0
  %v1663 = vrcp.pop %v1662
  %v1664 = vmul.f32 1.0, %v1663
  %v1665 = vtanh.pop %v1656
  %v1666 = vmul.f32 %v1664, %v1577
  %1668 = vrot.lane.b32.xlu0 %v1665, 64
  %v1669 = vpop.permute.xlu0 %1668
  %v1671 = vmul.f32 %v1664, %v1669
  %1673 = vrot.lane.b32.xlu0 %v1671, 32
  %v1674 = vpop.permute.xlu0 %1673
  %v1676 = vadd.f32 %v1666, %v1674
  %v1677 = vtanh.pop %v1676
  %1679 = vrot.lane.b32.xlu0 %v1677, 64
  %v1680 = vpop.permute.xlu0 %1679
  %v1682 = vmul.f32 %v1664, %v1680
  %1684 = vrot.lane.b32.xlu0 %v1682, 32
  %v1685 = vpop.permute.xlu0 %1684
  %v1686 = vsel %vm289, %v1685, 0
  %1688 = vmatprep.subr.mxu0 0.0
  %1689 = vmatpush1.msra.mxu0 %v46
  %1690 = vmatprep.subr.mxu0 0.0
  %1691 = vmatpush1.msra.mxu0 %v47
  %1692 = vmatprep.subr.mxu0 0.0
  %1693 = vmatpush1.msra.mxu0 %v48
  %1694 = vmatprep.subr.mxu0 0.0
  %1695 = vmatpush1.msra.mxu0 %v49
  %1696 = vmatprep.subr.mxu0 0.0
  %1697 = vmatpush1.msra.mxu0 0.0
  %1698 = vmatprep.subr.mxu0 0.0
  %1699 = vmatpush1.msra.mxu0 0.0
  %1700 = vmatprep.subr.mxu0 0.0
  %1701 = vmatpush1.msra.mxu0 0.0
  %1702 = vmatprep.subr.mxu0 0.0
  %1703 = vmatpush1.msra.mxu0 0.0
  %1704 = vmatprep.subr.mxu0 0.0
  %1705 = vmatpush1.msra.mxu0 0.0
  %1706 = vmatprep.subr.mxu0 0.0
  %1707 = vmatpush1.msra.mxu0 0.0
  %1708 = vmatprep.subr.mxu0 0.0
  %1709 = vmatpush1.msra.mxu0 0.0
  %1710 = vmatprep.subr.mxu0 0.0
  %1711 = vmatpush1.msra.mxu0 0.0
  %1712 = vmatprep.subr.mxu0 0.0
  %1713 = vmatpush1.msra.mxu0 0.0
  %1714 = vmatprep.subr.mxu0 0.0
  %1715 = vmatpush1.msra.mxu0 0.0
  %1716 = vmatprep.subr.mxu0 0.0
  %1717 = vmatpush1.msra.mxu0 0.0
  %1718 = vmatprep.subr.mxu0 0.0
  %1719 = vmatpush1.msra.mxu0 0.0
  %1720 = vmatprep.subr.mxu0 0.0
  %1721 = vmatpush1.msra.mxu0 0.0
  %1722 = vmatprep.subr.mxu0 0.0
  %1723 = vmatpush1.msra.mxu0 0.0
  %1724 = vmatprep.subr.mxu0 0.0
  %1725 = vmatpush1.msra.mxu0 0.0
  %1726 = vmatprep.subr.mxu0 0.0
  %1727 = vmatpush1.msra.mxu0 0.0
  %1728 = vmatprep.subr.mxu0 0.0
  %1729 = vmatpush1.msra.mxu0 0.0
  %1730 = vmatprep.subr.mxu0 0.0
  %1731 = vmatpush1.msra.mxu0 0.0
  %1732 = vmatprep.subr.mxu0 0.0
  %1733 = vmatpush1.msra.mxu0 0.0
  %1734 = vmatprep.subr.mxu0 0.0
  %1735 = vmatpush1.msra.mxu0 0.0
  %1736 = vmatprep.subr.mxu0 0.0
  %1737 = vmatpush1.msra.mxu0 0.0
  %1738 = vmatprep.subr.mxu0 0.0
  %1739 = vmatpush1.msra.mxu0 0.0
  %1740 = vmatprep.subr.mxu0 0.0
  %1741 = vmatpush1.msra.mxu0 0.0
  %1742 = vmatprep.subr.mxu0 0.0
  %1743 = vmatpush1.msra.mxu0 0.0
  %1744 = vmatprep.subr.mxu0 0.0
  %1745 = vmatpush1.msra.mxu0 0.0
  %1746 = vmatprep.subr.mxu0 0.0
  %1747 = vmatpush1.msra.mxu0 0.0
  %1748 = vmatprep.subr.mxu0 0.0
  %1749 = vmatpush1.msra.mxu0 0.0
  %1750 = vmatprep.subr.mxu0 0.0
  %1751 = vmatpush1.msra.mxu0 0.0
  %1752 = vmatprep.mubr.f32.mxu0 0.0
  %1753 = vmatmul.mubr.f32.gmra.mrb[0].mxu0 %v1686
  %v1754 = vpop.f32.mrb[0].mxu0
  %v1755 = vadd.f32 %v287, %v1754
  %v1756 = vpop.f32.mrb[0].mxu0
  %1757 = vdwg.mxu0
  %v1758 = vxor.u32 %v1755, 2147483648
  %v1759 = vmul.f32 %v1758, 1.442695
  %v1760 = vpow.pop %v1759
  %v1761 = vadd.f32 %v1760, 1.0
  %v1762 = vrcp.pop %v1761
  %v1763 = vmul.f32 1.0, %v1762
  %v1764 = vtanh.pop %v1755
  %v1765 = vmul.f32 %v1763, %v1676
  %1767 = vrot.lane.b32.xlu0 %v1764, 64
  %v1768 = vpop.permute.xlu0 %1767
  %v1770 = vmul.f32 %v1763, %v1768
  %1772 = vrot.lane.b32.xlu0 %v1770, 32
  %v1773 = vpop.permute.xlu0 %1772
  %v1775 = vadd.f32 %v1765, %v1773
  %v1776 = vtanh.pop %v1775
  %1778 = vrot.lane.b32.xlu0 %v1776, 64
  %v1779 = vpop.permute.xlu0 %1778
  %v1781 = vmul.f32 %v1763, %v1779
  %1783 = vrot.lane.b32.xlu0 %v1781, 32
  %v1784 = vpop.permute.xlu0 %1783
  %v1785 = vsel %vm289, %v1784, 0
  %1787 = vmatprep.subr.mxu0 0.0
  %1788 = vmatpush1.msra.mxu0 %v46
  %1789 = vmatprep.subr.mxu0 0.0
  %1790 = vmatpush1.msra.mxu0 %v47
  %1791 = vmatprep.subr.mxu0 0.0
  %1792 = vmatpush1.msra.mxu0 %v48
  %1793 = vmatprep.subr.mxu0 0.0
  %1794 = vmatpush1.msra.mxu0 %v49
  %1795 = vmatprep.subr.mxu0 0.0
  %1796 = vmatpush1.msra.mxu0 0.0
  %1797 = vmatprep.subr.mxu0 0.0
  %1798 = vmatpush1.msra.mxu0 0.0
  %1799 = vmatprep.subr.mxu0 0.0
  %1800 = vmatpush1.msra.mxu0 0.0
  %1801 = vmatprep.subr.mxu0 0.0
  %1802 = vmatpush1.msra.mxu0 0.0
  %1803 = vmatprep.subr.mxu0 0.0
  %1804 = vmatpush1.msra.mxu0 0.0
  %1805 = vmatprep.subr.mxu0 0.0
  %1806 = vmatpush1.msra.mxu0 0.0
  %1807 = vmatprep.subr.mxu0 0.0
  %1808 = vmatpush1.msra.mxu0 0.0
  %1809 = vmatprep.subr.mxu0 0.0
  %1810 = vmatpush1.msra.mxu0 0.0
  %1811 = vmatprep.subr.mxu0 0.0
  %1812 = vmatpush1.msra.mxu0 0.0
  %1813 = vmatprep.subr.mxu0 0.0
  %1814 = vmatpush1.msra.mxu0 0.0
  %1815 = vmatprep.subr.mxu0 0.0
  %1816 = vmatpush1.msra.mxu0 0.0
  %1817 = vmatprep.subr.mxu0 0.0
  %1818 = vmatpush1.msra.mxu0 0.0
  %1819 = vmatprep.subr.mxu0 0.0
  %1820 = vmatpush1.msra.mxu0 0.0
  %1821 = vmatprep.subr.mxu0 0.0
  %1822 = vmatpush1.msra.mxu0 0.0
  %1823 = vmatprep.subr.mxu0 0.0
  %1824 = vmatpush1.msra.mxu0 0.0
  %1825 = vmatprep.subr.mxu0 0.0
  %1826 = vmatpush1.msra.mxu0 0.0
  %1827 = vmatprep.subr.mxu0 0.0
  %1828 = vmatpush1.msra.mxu0 0.0
  %1829 = vmatprep.subr.mxu0 0.0
  %1830 = vmatpush1.msra.mxu0 0.0
  %1831 = vmatprep.subr.mxu0 0.0
  %1832 = vmatpush1.msra.mxu0 0.0
  %1833 = vmatprep.subr.mxu0 0.0
  %1834 = vmatpush1.msra.mxu0 0.0
  %1835 = vmatprep.subr.mxu0 0.0
  %1836 = vmatpush1.msra.mxu0 0.0
  %1837 = vmatprep.subr.mxu0 0.0
  %1838 = vmatpush1.msra.mxu0 0.0
  %1839 = vmatprep.subr.mxu0 0.0
  %1840 = vmatpush1.msra.mxu0 0.0
  %1841 = vmatprep.subr.mxu0 0.0
  %1842 = vmatpush1.msra.mxu0 0.0
  %1843 = vmatprep.subr.mxu0 0.0
  %1844 = vmatpush1.msra.mxu0 0.0
  %1845 = vmatprep.subr.mxu0 0.0
  %1846 = vmatpush1.msra.mxu0 0.0
  %1847 = vmatprep.subr.mxu0 0.0
  %1848 = vmatpush1.msra.mxu0 0.0
  %1849 = vmatprep.subr.mxu0 0.0
  %1850 = vmatpush1.msra.mxu0 0.0
  %1851 = vmatprep.mubr.f32.mxu0 0.0
  %1852 = vmatmul.mubr.f32.gmra.mrb[0].mxu0 %v1785
  %v1853 = vpop.f32.mrb[0].mxu0
  %v1854 = vadd.f32 %v287, %v1853
  %v1855 = vpop.f32.mrb[0].mxu0
  %1856 = vdwg.mxu0
  %v1857 = vxor.u32 %v1854, 2147483648
  %v1858 = vmul.f32 %v1857, 1.442695
  %v1859 = vpow.pop %v1858
  %v1860 = vadd.f32 %v1859, 1.0
  %v1861 = vrcp.pop %v1860
  %v1862 = vmul.f32 1.0, %v1861
  %v1863 = vtanh.pop %v1854
  %v1864 = vmul.f32 %v1862, %v1775
  %1866 = vrot.lane.b32.xlu0 %v1863, 64
  %v1867 = vpop.permute.xlu0 %1866
  %v1869 = vmul.f32 %v1862, %v1867
  %1871 = vrot.lane.b32.xlu0 %v1869, 32
  %v1872 = vpop.permute.xlu0 %1871
  %v1874 = vadd.f32 %v1864, %v1872
  %v1875 = vtanh.pop %v1874
  %1877 = vrot.lane.b32.xlu0 %v1875, 64
  %v1878 = vpop.permute.xlu0 %1877
  %v1880 = vmul.f32 %v1862, %v1878
  %v1881 = vld [vmem:[%s10] sm:$0x1]
  %v1883 = vlaneseq
  %v1884 = vshrl.u32 %v1883, 7
  %v1885 = vsub.s32 0, %v1884
  %v1886 = vrot.slane %v1881, %v1885
  %1889 = vrot.lane.b32.xlu0 %v1880, 32
  %v1890 = vpop.permute.xlu0 %1889
  %v1891 = vsel %vm289, %v1890, 0
  %1893 = vmatprep.subr.mxu0 0.0
  %1894 = vmatpush1.msra.mxu0 %v50
  %1895 = vmatprep.subr.mxu0 0.0
  %1896 = vmatpush1.msra.mxu0 %v51
  %1897 = vmatprep.subr.mxu0 0.0
  %1898 = vmatpush1.msra.mxu0 %v52
  %1899 = vmatprep.subr.mxu0 0.0
  %1900 = vmatpush1.msra.mxu0 %v53
  %1901 = vmatprep.subr.mxu0 0.0
  %1902 = vmatpush1.msra.mxu0 0.0
  %1903 = vmatprep.subr.mxu0 0.0
  %1904 = vmatpush1.msra.mxu0 0.0
  %1905 = vmatprep.subr.mxu0 0.0
  %1906 = vmatpush1.msra.mxu0 0.0
  %1907 = vmatprep.subr.mxu0 0.0
  %1908 = vmatpush1.msra.mxu0 0.0
  %1909 = vmatprep.subr.mxu0 0.0
  %1910 = vmatpush1.msra.mxu0 0.0
  %1911 = vmatprep.subr.mxu0 0.0
  %1912 = vmatpush1.msra.mxu0 0.0
  %1913 = vmatprep.subr.mxu0 0.0
  %1914 = vmatpush1.msra.mxu0 0.0
  %1915 = vmatprep.subr.mxu0 0.0
  %1916 = vmatpush1.msra.mxu0 0.0
  %1917 = vmatprep.subr.mxu0 0.0
  %1918 = vmatpush1.msra.mxu0 0.0
  %1919 = vmatprep.subr.mxu0 0.0
  %1920 = vmatpush1.msra.mxu0 0.0
  %1921 = vmatprep.subr.mxu0 0.0
  %1922 = vmatpush1.msra.mxu0 0.0
  %1923 = vmatprep.subr.mxu0 0.0
  %1924 = vmatpush1.msra.mxu0 0.0
  %1925 = vmatprep.subr.mxu0 0.0
  %1926 = vmatpush1.msra.mxu0 0.0
  %1927 = vmatprep.subr.mxu0 0.0
  %1928 = vmatpush1.msra.mxu0 0.0
  %1929 = vmatprep.subr.mxu0 0.0
  %1930 = vmatpush1.msra.mxu0 0.0
  %1931 = vmatprep.subr.mxu0 0.0
  %1932 = vmatpush1.msra.mxu0 0.0
  %1933 = vmatprep.subr.mxu0 0.0
  %1934 = vmatpush1.msra.mxu0 0.0
  %1935 = vmatprep.subr.mxu0 0.0
  %1936 = vmatpush1.msra.mxu0 0.0
  %1937 = vmatprep.subr.mxu0 0.0
  %1938 = vmatpush1.msra.mxu0 0.0
  %1939 = vmatprep.subr.mxu0 0.0
  %1940 = vmatpush1.msra.mxu0 0.0
  %1941 = vmatprep.subr.mxu0 0.0
  %1942 = vmatpush1.msra.mxu0 0.0
  %1943 = vmatprep.subr.mxu0 0.0
  %1944 = vmatpush1.msra.mxu0 0.0
  %1945 = vmatprep.subr.mxu0 0.0
  %1946 = vmatpush1.msra.mxu0 0.0
  %1947 = vmatprep.subr.mxu0 0.0
  %1948 = vmatpush1.msra.mxu0 0.0
  %1949 = vmatprep.subr.mxu0 0.0
  %1950 = vmatpush1.msra.mxu0 0.0
  %1951 = vmatprep.subr.mxu0 0.0
  %1952 = vmatpush1.msra.mxu0 0.0
  %1953 = vmatprep.subr.mxu0 0.0
  %1954 = vmatpush1.msra.mxu0 0.0
  %1955 = vmatprep.subr.mxu0 0.0
  %1956 = vmatpush1.msra.mxu0 0.0
  %1957 = vmatprep.mubr.f32.mxu0 0.0
  %1958 = vmatmul.mubr.f32.gmra.mrb[0].mxu0 %v1191
  %v1959 = vpop.f32.mrb[0].mxu0
  %v1960 = vadd.f32 %v1886, %v1959
  %v1961 = vpop.f32.mrb[0].mxu0
  %1962 = vmatprep.mubr.f32.mxu0 0.0
  %1963 = vmatmul.mubr.f32.gmra.mrb[0].mxu0 %v1290
  %v1964 = vpop.f32.mrb[0].mxu0
  %v1965 = vadd.f32 %v1886, %v1964
  %v1966 = vpop.f32.mrb[0].mxu0
  %1967 = vmatprep.mubr.f32.mxu0 0.0
  %1968 = vmatmul.mubr.f32.gmra.mrb[0].mxu0 %v1389
  %v1969 = vpop.f32.mrb[0].mxu0
  %v1970 = vadd.f32 %v1886, %v1969
  %v1971 = vpop.f32.mrb[0].mxu0
  %1972 = vmatprep.mubr.f32.mxu0 0.0
  %1973 = vmatmul.mubr.f32.gmra.mrb[0].mxu0 %v1488
  %v1974 = vpop.f32.mrb[0].mxu0
  %v1975 = vadd.f32 %v1886, %v1974
  %v1976 = vpop.f32.mrb[0].mxu0
  %1977 = vmatprep.mubr.f32.mxu0 0.0
  %1978 = vmatmul.mubr.f32.gmra.mrb[0].mxu0 %v1587
  %v1979 = vpop.f32.mrb[0].mxu0
  %v1980 = vadd.f32 %v1886, %v1979
  %v1981 = vpop.f32.mrb[0].mxu0
  %1982 = vmatprep.mubr.f32.mxu0 0.0
  %1983 = vmatmul.mubr.f32.gmra.mrb[0].mxu0 %v1686
  %v1984 = vpop.f32.mrb[0].mxu0
  %v1985 = vadd.f32 %v1886, %v1984
  %v1986 = vpop.f32.mrb[0].mxu0
  %1987 = vmatprep.mubr.f32.mxu0 0.0
  %1988 = vmatmul.mubr.f32.gmra.mrb[0].mxu0 %v1785
  %v1989 = vpop.f32.mrb[0].mxu0
  %v1990 = vadd.f32 %v1886, %v1989
  %v1991 = vpop.f32.mrb[0].mxu0
  %1992 = vmatprep.mubr.f32.mxu0 0.0
  %1993 = vmatmul.mubr.f32.gmra.mrb[0].mxu0 %v1891
  %v1994 = vpop.f32.mrb[0].mxu0
  %v1995 = vadd.f32 %v1886, %v1994
  %v1996 = vpop.f32.mrb[0].mxu0
  %1997 = vdwg.mxu0
  %1998 = vst.msk [vmem:[%s11] sm:$0xff] %vm70, %v1960
  %1999 = vst.msk [vmem:[%s11 + $0x8] sm:$0xff] %vm70, %v1965
  %2000 = vst.msk [vmem:[%s11 + $0x10] sm:$0xff] %vm70, %v1970
  %2001 = vst.msk [vmem:[%s11 + $0x18] sm:$0xff] %vm70, %v1975
  %2002 = vst.msk [vmem:[%s11 + $0x20] sm:$0xff] %vm70, %v1980
  %2003 = vst.msk [vmem:[%s11 + $0x28] sm:$0xff] %vm70, %v1985
  %2004 = vst.msk [vmem:[%s11 + $0x30] sm:$0xff] %vm70, %v1990
  %2005 = vst.msk [vmem:[%s11 + $0x38] sm:$0xff] %vm70, %v1995
  // Predicated region
  $region46: #{seq2seq_forward.1} parent=0 // pred_check
    _
  $region47: #{seq2seq_forward.1} parent=0 // pred_check_branch
    %2007 = sbr.rel (0) target = $region49
  $region48: #{seq2seq_forward.1} parent=0 // pred_region
    _
  $region49: #{seq2seq_forward.1} parent=0 // pred_fallthru
    _
  // Predicated region
  $region50: #{seq2seq_forward.1} parent=0 // pred_check
    _
  $region51: #{seq2seq_forward.1} parent=0 // pred_check_branch
    %2009 = sbr.rel (0) target = $region53
  $region52: #{seq2seq_forward.1} parent=0 // pred_region
    _
  $region53: #{seq2seq_forward.1} parent=0 // pred_fallthru
    _

</llo_original>
